<compile_context>
chip_gen: v5e
topology: v5e:2x2
jax: 0.10.0
libtpu: 0.0.40
codegen_flags: <defaults>
</compile_context>

<pallas_src>
import functools

import jax
import jax.numpy as jnp
import numpy as np
from jax.experimental import pallas as pl
from jax.experimental.pallas import tpu as pltpu


# ---------------------------------------------------------------------------
# Kernel
# ---------------------------------------------------------------------------
def _mha_kernel(x_ref, wq_ref, wk_ref, wv_ref, wo_ref, b_ref, o_ref, acc_ref,
                *, group_size, head_dim, q_chunk, q_tile, num_q_tiles,
                compute_dtype):
    """One (batch, query-chunk, head-group) grid step of fused MHSA."""
    G, hd, NQ, TQ, NT = group_size, head_dim, q_chunk, q_tile, num_q_tiles
    cdt = compute_dtype
    hg = pl.program_id(2)

    @pl.when(hg == 0)
    def _init():
        acc_ref[...] = jnp.zeros_like(acc_ref)

    # Grid-resident weights; select this step's head group inside the kernel.
    wq = wq_ref[hg]                       # (C, G*hd)   (1/sqrt(hd) folded in)
    wk = wk_ref[hg]                       # (C, G*hd)
    wv = wv_ref[hg]                       # (C, G*hd)
    wo = wo_ref[hg]                       # (G*hd, C)

    # Full-sequence K / V for this head group: two wide MXU matmuls, computed
    # once per grid step and reused by every query tile below.
    x_full = x_ref[0].astype(cdt)         # (N, C)
    k = jnp.dot(x_full, wk, preferred_element_type=jnp.float32).astype(cdt)
    v = jnp.dot(x_full, wv, preferred_element_type=jnp.float32).astype(cdt)
    # Split the G heads onto a leading (major) axis for batched attention
    # matmuls (static lane slices + stack; no tiled-dim reshape needed).
    k3 = jnp.stack([k[:, g * hd:(g + 1) * hd] for g in range(G)], axis=0)
    v3 = jnp.stack([v[:, g * hd:(g + 1) * hd] for g in range(G)], axis=0)

    q_row0 = pl.program_id(1) * NQ        # first query row of this chunk
    align = 128 if TQ % 128 == 0 else (8 if TQ % 8 == 0 else 1)

    @pl.loop(0, NT)
    def _q_tile(t):
        local = t * TQ                    # row offset inside this query chunk
        if align > 1:
            local = pl.multiple_of(local, align)
        # Query-tile projection (wide MXU matmul).
        xq = x_ref[0, pl.ds(q_row0 + local, TQ), :].astype(cdt)      # (TQ, C)
        q = jnp.dot(xq, wq, preferred_element_type=jnp.float32).astype(cdt)
        q3 = jnp.stack([q[:, g * hd:(g + 1) * hd] for g in range(G)], axis=0)

        # Per-head scores / softmax (f32 statistics), batched over G heads.
        s = jnp.einsum('gqd,gkd->gqk', q3, k3,
                       preferred_element_type=jnp.float32)           # (G,TQ,N)
        m = jnp.max(s, axis=-1, keepdims=True)
        p = jnp.exp(s - m)
        den = jnp.sum(p, axis=-1, keepdims=True)                     # (G,TQ,1)

        ctx3 = jnp.einsum('gqk,gkd->gqd', p.astype(cdt), v3,
                          preferred_element_type=jnp.float32)        # (G,TQ,hd)
        ctx3 = ctx3 * pl.reciprocal(den)  # deferred (exact) softmax normalize
        # Re-pack heads onto lanes for the G*hd-deep output projection.
        ctx = jnp.concatenate([ctx3[g] for g in range(G)],
                              axis=-1).astype(cdt)                   # (TQ,G*hd)

        acc_ref[pl.ds(local, TQ), :] += jnp.dot(
            ctx, wo, preferred_element_type=jnp.float32)             # (TQ, C)

    @pl.when(hg == pl.num_programs(2) - 1)
    def _finalize():
        o_ref[0] = (acc_ref[...] + b_ref[...]).astype(o_ref.dtype)


# ---------------------------------------------------------------------------
# Wrapper helpers
# ---------------------------------------------------------------------------
def _sublane_multiple(dtype):
    # Sublane tile depth scales with packing: f32 -> 8, bf16 -> 16, int8 -> 32.
    return max(8, 32 // jnp.dtype(dtype).itemsize)


def _padded_bytes(shape, dtype):
    """Bytes of a tile after TPU (sublane, 128-lane) padding of the minor dims."""
    s = [int(d) for d in shape]
    s[-1] = -(-s[-1] // 128) * 128
    if len(s) >= 2:
        sub = _sublane_multiple(dtype)
        s[-2] = -(-s[-2] // sub) * sub
    n = 1
    for d in s:
        n *= d
    return n * jnp.dtype(dtype).itemsize


def _pick_head_group(num_heads, head_dim):
    """Heads fused per grid step so G*head_dim ~ 256 (v6e/v7x MXU width)."""
    g = max(1, min(num_heads, 256 // max(head_dim, 1)))
    while num_heads % g:
        g -= 1
    return g


def _vmem_capacity_bytes():
    try:
        cap = getattr(pltpu.get_tpu_info(), "vmem_capacity_bytes", None)
        if cap:
            return int(cap)
    except Exception:
        pass
    return 64 << 20           # conservative fallback (v7x per-core VMEM)


def _pick_q_tiling(batch, seq, group_size, vmem_cap):
    # Outer query split: a second "parallel" grid axis so B == 1 inference
    # still feeds both of v7x's TensorCores (v5e/v6e: harmless, trip count 1/2).
    qsplit = 2 if (batch == 1 and seq >= 1024 and seq % 16 == 0) else 1
    nq = seq // qsplit
    # Inner query tile: bound the (G, TQ, N) f32 score/prob intermediates.
    budget = max(8 << 20, vmem_cap // 3)
    tq = nq
    if 2 * group_size * tq * seq * 4 > budget:
        for cand in (512, 256, 128, 64, 32, 16, 8):
            if nq % cand == 0:
                tq = cand
                if 2 * group_size * tq * seq * 4 <= budget:
                    break
    return qsplit, nq, tq


def prepare_attention_weights(wqkv, wproj, bproj, num_heads, group_size,
                              compute_dtype=jnp.bfloat16):
    """One-time re-layout of the PyTorch parameters into kernel layout.

    For frozen weights, cache the result so the transpose / scale-fold / cast
    is not repeated on every forward call.
    """
    C = wproj.shape[0]
    hd = C // num_heads
    HG = num_heads // group_size
    scale = hd ** (-0.5)

    def to_xw(w_rows):           # (H*hd, C) output-features -> (HG, C, G*hd)
        w = w_rows.reshape(HG, group_size, hd, C)
        return w.transpose(0, 3, 1, 2).reshape(HG, C, group_size * hd)

    wq = to_xw(wqkv[0 * C:1 * C] * scale)        # fold 1/sqrt(hd) into Wq
    wk = to_xw(wqkv[1 * C:2 * C])
    wv = to_xw(wqkv[2 * C:3 * C])
    wo = wproj.T.reshape(HG, group_size * hd, C)
    bias = bproj.reshape(1, C).astype(jnp.float32)
    cdt = compute_dtype
    return (wq.astype(cdt), wk.astype(cdt), wv.astype(cdt), wo.astype(cdt), bias)


# ---------------------------------------------------------------------------
# Public entry point
# ---------------------------------------------------------------------------
def attention(x, wqkv, wproj, bproj, num_heads, *, compute_dtype=jnp.bfloat16):
    """Forward pass of the PyTorch `Attention` module.

    Output dtype follows x; matmul operands use `compute_dtype` (bf16 default)
    with f32 accumulation and f32 softmax statistics.  attn_drop / proj_drop
    (module defaults p=0.0) are identity and omitted.
    """
    B, N, C = x.shape
    assert C % num_heads == 0, "dim must be divisible by num_heads"
    hd = C // num_heads
    G = _pick_head_group(num_heads, hd)
    HG = num_heads // G
    Ghd = G * hd

    vmem_cap = _vmem_capacity_bytes()
    qsplit, NQ, TQ = _pick_q_tiling(B, N, G, vmem_cap)
    NT = NQ // TQ

    wq, wk, wv, wo, bias = prepare_attention_weights(
        wqkv, wproj, bproj, num_heads, G, compute_dtype)

    kernel = functools.partial(
        _mha_kernel, group_size=G, head_dim=hd, q_chunk=NQ, q_tile=TQ,
        num_q_tiles=NT, compute_dtype=compute_dtype)

    # --- generation-aware VMEM budget (capacity minus headroom) -------------
    cdt = compute_dtype
    need = (
        2 * _padded_bytes((N, C), x.dtype)                 # x block (dbl-buffered)
        + 2 * _padded_bytes((NQ, C), x.dtype)              # out block
        + 2 * 3 * _padded_bytes((HG, C, Ghd), cdt)         # wq/wk/wv (resident)
        + 2 * _padded_bytes((HG, Ghd, C), cdt)             # wo
        + 2 * _padded_bytes((1, C), jnp.float32)           # proj bias
        + _padded_bytes((NQ, C), jnp.float32)              # acc scratch
        + _padded_bytes((N, C), cdt)                       # x cast
        + 4 * _padded_bytes((N, Ghd), cdt)                 # k, v, k3, v3
        + 2 * _padded_bytes((TQ, Ghd), jnp.float32)        # q / q3
        + 2 * G * _padded_bytes((TQ, N), jnp.float32)      # scores, probs
        + G * _padded_bytes((TQ, N), cdt)                  # probs (compute dtype)
        + 2 * G * _padded_bytes((TQ, hd), jnp.float32)     # ctx3
        + _padded_bytes((TQ, Ghd), cdt)                    # ctx re-pack
        + _padded_bytes((TQ, C), jnp.float32)              # out-proj partial
    )
    usable = max(vmem_cap - (12 << 20), 32 << 20)
    vmem_limit = int(min(usable, max(32 << 20, need * 3 // 2)))

    return pl.pallas_call(
        kernel,
        out_shape=jax.ShapeDtypeStruct((B, N, C), x.dtype),
        grid=(B, qsplit, HG),
        in_specs=[
            pl.BlockSpec((1, N, C), lambda b, qs, h: (b, 0, 0)),      # x
            pl.BlockSpec((HG, C, Ghd), lambda b, qs, h: (0, 0, 0)),   # wq (resident)
            pl.BlockSpec((HG, C, Ghd), lambda b, qs, h: (0, 0, 0)),   # wk
            pl.BlockSpec((HG, C, Ghd), lambda b, qs, h: (0, 0, 0)),   # wv
            pl.BlockSpec((HG, Ghd, C), lambda b, qs, h: (0, 0, 0)),   # wo
            pl.BlockSpec((1, C), lambda b, qs, h: (0, 0)),            # proj bias
        ],
        out_specs=pl.BlockSpec((1, NQ, C), lambda b, qs, h: (b, qs, 0)),
        scratch_shapes=[pltpu.VMEM((NQ, C), jnp.float32)],
        compiler_params=pltpu.CompilerParams(
            dimension_semantics=("parallel", "parallel", "arbitrary"),
            vmem_limit_bytes=vmem_limit),
    )(x, wq, wk, wv, wo, bias)


# ---------------------------------------------------------------------------
# Pure-JAX reference and self-test
# ---------------------------------------------------------------------------
def attention_ref(x, wqkv, wproj, bproj, num_heads):
    """Pure-JAX f32 reference mirroring the PyTorch forward."""
    B, N, C = x.shape
    hd = C // num_heads
    scale = hd ** (-0.5)
    qkv = jnp.einsum('bnc,oc->bno', x, wqkv)                     # (B, N, 3C)
    qkv = qkv.reshape(B, N, 3, num_heads, hd).transpose(2, 0, 3, 1, 4)
    q, k, v = qkv[0], qkv[1], qkv[2]                             # (B, H, N, hd)
    attn = jnp.einsum('bhnd,bhmd->bhnm', q, k) * scale
    attn = jax.nn.softmax(attn, axis=-1)
    out = jnp.einsum('bhnm,bhmd->bhnd', attn, v)                 # (B, H, N, hd)
    out = out.transpose(0, 2, 1, 3).reshape(B, N, C)
    return jnp.einsum('bnc,oc->bno', out, wproj) + bproj[0]


if __name__ == "__main__":
    B, N, C = 2, 16, 64
    num_heads = 8

    key = jax.random.PRNGKey(0)
    kx, kqkv, kproj, kb = jax.random.split(key, 4)

    x = jax.random.normal(kx, (B, N, C), dtype=jnp.float32)
    wqkv = jax.random.normal(kqkv, (3 * C, C), dtype=jnp.float32) / np.sqrt(C)
    wproj = jax.random.normal(kproj, (C, C), dtype=jnp.float32) / np.sqrt(C)
    bproj = jax.random.normal(kb, (1, C), dtype=jnp.float32) * 0.01

    ref = attention_ref(x, wqkv, wproj, bproj, num_heads)

    # 1) f32-compute path: tight structural / numerical check of the kernel.
    out_f32 = jax.block_until_ready(
        attention(x, wqkv, wproj, bproj, num_heads, compute_dtype=jnp.float32))
    np.testing.assert_allclose(np.asarray(out_f32), np.asarray(ref),
                               rtol=1e-2, atol=1e-2)

    # 2) bf16-operand production path (MXU-native): loose check vs f32 ref.
    out_bf16 = jax.block_until_ready(
        attention(x, wqkv, wproj, bproj, num_heads, compute_dtype=jnp.bfloat16))
    np.testing.assert_allclose(np.asarray(out_bf16), np.asarray(ref),
                               rtol=1e-1, atol=1e-1)

    print("KERNEL_OK")
</pallas_src>

<mosaic_0001>
module attributes {stable_mosaic.version = 11 : i64} {
  func.func @_mha_kernel(%arg0: i32, %arg1: i32, %arg2: i32, %arg3: memref<1x16x64xf32, #tpu.memory_space<vmem>>, %arg4: memref<1x64x64xf32, #tpu.memory_space<vmem>>, %arg5: memref<1x64x64xf32, #tpu.memory_space<vmem>>, %arg6: memref<1x64x64xf32, #tpu.memory_space<vmem>>, %arg7: memref<1x64x64xf32, #tpu.memory_space<vmem>>, %arg8: memref<1x64xf32, #tpu.memory_space<vmem>>, %arg9: memref<1x16x64xf32, #tpu.memory_space<vmem>>, %arg10: memref<16x64xf32, #tpu.memory_space<vmem>>) attributes {dimension_semantics = [#tpu.dimension_semantics<parallel>, #tpu.dimension_semantics<parallel>, #tpu.dimension_semantics<arbitrary>], iteration_bounds = array<i64: 2, 1, 1>, scalar_prefetch = 0 : i64, scratch_operands = 1 : i64, tpu.core_type = #tpu.core_type<tc>, window_params = [{transform_indices = @transform_0, window_bounds = array<i64: 1, 16, 64>}, {pipeline_mode = #tpu.pipeline_mode<synchronous>, transform_indices = @transform_1, window_bounds = array<i64: 1, 64, 64>}, {pipeline_mode = #tpu.pipeline_mode<synchronous>, transform_indices = @transform_2, window_bounds = array<i64: 1, 64, 64>}, {pipeline_mode = #tpu.pipeline_mode<synchronous>, transform_indices = @transform_3, window_bounds = array<i64: 1, 64, 64>}, {pipeline_mode = #tpu.pipeline_mode<synchronous>, transform_indices = @transform_4, window_bounds = array<i64: 1, 64, 64>}, {pipeline_mode = #tpu.pipeline_mode<synchronous>, transform_indices = @transform_5, window_bounds = array<i64: 1, 64>}, {transform_indices = @transform_6, window_bounds = array<i64: 1, 16, 64>}]} {
    %c0_i32 = arith.constant 0 : i32
    %0 = arith.cmpi eq, %arg2, %c0_i32 : i32
    %1 = arith.extui %0 : i1 to i32
    %c0_i32_0 = arith.constant 0 : i32
    %2 = arith.cmpi ne, %1, %c0_i32_0 : i32
    scf.if %2 {
      %cst_28 = arith.constant 0.000000e+00 : f32
      %118 = vector.broadcast %cst_28 : f32 to vector<16x64xf32>
      %c0_29 = arith.constant 0 : index
      %c0_30 = arith.constant 0 : index
      %119 = vector.load %arg10[%c0_29, %c0_30] : memref<16x64xf32, #tpu.memory_space<vmem>>, vector<16x64xf32>
      tpu.vector_store %arg10[%c0_29, %c0_30], %118 {strides = array<i32>} : memref<16x64xf32, #tpu.memory_space<vmem>>, vector<16x64xf32>,
    } else {
    }
    %3 = arith.index_cast %arg2 : i32 to index
    %c0 = arith.constant 0 : index
    %c0_1 = arith.constant 0 : index
    %4 = vector.load %arg4[%3, %c0, %c0_1] : memref<1x64x64xf32, #tpu.memory_space<vmem>>, vector<1x64x64xf32>
    %5 = vector.shape_cast %4 : vector<1x64x64xf32> to vector<64x64xf32>
    %6 = arith.index_cast %arg2 : i32 to index
    %c0_2 = arith.constant 0 : index
    %c0_3 = arith.constant 0 : index
    %7 = vector.load %arg5[%6, %c0_2, %c0_3] : memref<1x64x64xf32, #tpu.memory_space<vmem>>, vector<1x64x64xf32>
    %8 = vector.shape_cast %7 : vector<1x64x64xf32> to vector<64x64xf32>
    %9 = arith.index_cast %arg2 : i32 to index
    %c0_4 = arith.constant 0 : index
    %c0_5 = arith.constant 0 : index
    %10 = vector.load %arg6[%9, %c0_4, %c0_5] : memref<1x64x64xf32, #tpu.memory_space<vmem>>, vector<1x64x64xf32>
    %11 = vector.shape_cast %10 : vector<1x64x64xf32> to vector<64x64xf32>
    %12 = arith.index_cast %arg2 : i32 to index
    %c0_6 = arith.constant 0 : index
    %c0_7 = arith.constant 0 : index
    %13 = vector.load %arg7[%12, %c0_6, %c0_7] : memref<1x64x64xf32, #tpu.memory_space<vmem>>, vector<1x64x64xf32>
    %14 = vector.shape_cast %13 : vector<1x64x64xf32> to vector<64x64xf32>
    %c0_8 = arith.constant 0 : index
    %c0_9 = arith.constant 0 : index
    %c0_10 = arith.constant 0 : index
    %15 = vector.load %arg3[%c0_8, %c0_9, %c0_10] : memref<1x16x64xf32, #tpu.memory_space<vmem>>, vector<1x16x64xf32>
    %16 = vector.shape_cast %15 : vector<1x16x64xf32> to vector<16x64xf32>
    %cst = arith.constant dense<0.000000e+00> : vector<16x64xf32>
    %17 = tpu.matmul %16, %8, %cst {dimension_numbers = #tpu.dot_dimension_numbers<[1], [0], [0], [1], [0, 0, 1, 1], [], []>} : vector<16x64xf32>, vector<64x64xf32>, vector<16x64xf32> -> vector<16x64xf32>
    %cst_11 = arith.constant dense<0.000000e+00> : vector<16x64xf32>
    %18 = tpu.matmul %16, %11, %cst_11 {dimension_numbers = #tpu.dot_dimension_numbers<[1], [0], [0], [1], [0, 0, 1, 1], [], []>} : vector<16x64xf32>, vector<64x64xf32>, vector<16x64xf32> -> vector<16x64xf32>
    %19 = vector.extract_strided_slice %17 {offsets = [0, 0], sizes = [16, 8], strides = [1, 1]} : vector<16x64xf32> to vector<16x8xf32>
    %20 = vector.extract_strided_slice %17 {offsets = [0, 8], sizes = [16, 8], strides = [1, 1]} : vector<16x64xf32> to vector<16x8xf32>
    %21 = vector.extract_strided_slice %17 {offsets = [0, 16], sizes = [16, 8], strides = [1, 1]} : vector<16x64xf32> to vector<16x8xf32>
    %22 = vector.extract_strided_slice %17 {offsets = [0, 24], sizes = [16, 8], strides = [1, 1]} : vector<16x64xf32> to vector<16x8xf32>
    %23 = vector.extract_strided_slice %17 {offsets = [0, 32], sizes = [16, 8], strides = [1, 1]} : vector<16x64xf32> to vector<16x8xf32>
    %24 = vector.extract_strided_slice %17 {offsets = [0, 40], sizes = [16, 8], strides = [1, 1]} : vector<16x64xf32> to vector<16x8xf32>
    %25 = vector.extract_strided_slice %17 {offsets = [0, 48], sizes = [16, 8], strides = [1, 1]} : vector<16x64xf32> to vector<16x8xf32>
    %26 = vector.extract_strided_slice %17 {offsets = [0, 56], sizes = [16, 8], strides = [1, 1]} : vector<16x64xf32> to vector<16x8xf32>
    %27 = vector.shape_cast %19 : vector<16x8xf32> to vector<1x16x8xf32>
    %28 = vector.shape_cast %20 : vector<16x8xf32> to vector<1x16x8xf32>
    %29 = vector.shape_cast %21 : vector<16x8xf32> to vector<1x16x8xf32>
    %30 = vector.shape_cast %22 : vector<16x8xf32> to vector<1x16x8xf32>
    %31 = vector.shape_cast %23 : vector<16x8xf32> to vector<1x16x8xf32>
    %32 = vector.shape_cast %24 : vector<16x8xf32> to vector<1x16x8xf32>
    %33 = vector.shape_cast %25 : vector<16x8xf32> to vector<1x16x8xf32>
    %34 = vector.shape_cast %26 : vector<16x8xf32> to vector<1x16x8xf32>
    %35 = tpu.concatenate %27, %28, %29, %30, %31, %32, %33, %34 in 0 : vector<1x16x8xf32>, vector<1x16x8xf32>, vector<1x16x8xf32>, vector<1x16x8xf32>, vector<1x16x8xf32>, vector<1x16x8xf32>, vector<1x16x8xf32>, vector<1x16x8xf32> -> vector<8x16x8xf32>
    %36 = vector.extract_strided_slice %18 {offsets = [0, 0], sizes = [16, 8], strides = [1, 1]} : vector<16x64xf32> to vector<16x8xf32>
    %37 = vector.extract_strided_slice %18 {offsets = [0, 8], sizes = [16, 8], strides = [1, 1]} : vector<16x64xf32> to vector<16x8xf32>
    %38 = vector.extract_strided_slice %18 {offsets = [0, 16], sizes = [16, 8], strides = [1, 1]} : vector<16x64xf32> to vector<16x8xf32>
    %39 = vector.extract_strided_slice %18 {offsets = [0, 24], sizes = [16, 8], strides = [1, 1]} : vector<16x64xf32> to vector<16x8xf32>
    %40 = vector.extract_strided_slice %18 {offsets = [0, 32], sizes = [16, 8], strides = [1, 1]} : vector<16x64xf32> to vector<16x8xf32>
    %41 = vector.extract_strided_slice %18 {offsets = [0, 40], sizes = [16, 8], strides = [1, 1]} : vector<16x64xf32> to vector<16x8xf32>
    %42 = vector.extract_strided_slice %18 {offsets = [0, 48], sizes = [16, 8], strides = [1, 1]} : vector<16x64xf32> to vector<16x8xf32>
    %43 = vector.extract_strided_slice %18 {offsets = [0, 56], sizes = [16, 8], strides = [1, 1]} : vector<16x64xf32> to vector<16x8xf32>
    %44 = vector.shape_cast %36 : vector<16x8xf32> to vector<1x16x8xf32>
    %45 = vector.shape_cast %37 : vector<16x8xf32> to vector<1x16x8xf32>
    %46 = vector.shape_cast %38 : vector<16x8xf32> to vector<1x16x8xf32>
    %47 = vector.shape_cast %39 : vector<16x8xf32> to vector<1x16x8xf32>
    %48 = vector.shape_cast %40 : vector<16x8xf32> to vector<1x16x8xf32>
    %49 = vector.shape_cast %41 : vector<16x8xf32> to vector<1x16x8xf32>
    %50 = vector.shape_cast %42 : vector<16x8xf32> to vector<1x16x8xf32>
    %51 = vector.shape_cast %43 : vector<16x8xf32> to vector<1x16x8xf32>
    %52 = tpu.concatenate %44, %45, %46, %47, %48, %49, %50, %51 in 0 : vector<1x16x8xf32>, vector<1x16x8xf32>, vector<1x16x8xf32>, vector<1x16x8xf32>, vector<1x16x8xf32>, vector<1x16x8xf32>, vector<1x16x8xf32>, vector<1x16x8xf32> -> vector<8x16x8xf32>
    %c16_i32 = arith.constant 16 : i32
    %53 = arith.muli %arg1, %c16_i32 : i32
    %c0_i32_12 = arith.constant 0 : i32
    %c1_i32 = arith.constant 1 : i32
    %54 = arith.muli %c0_i32_12, %c1_i32 : i32
    %c0_i32_13 = arith.constant 0 : i32
    %55 = arith.addi %c0_i32_13, %54 : i32
    %c16_i32_14 = arith.constant 16 : i32
    %56 = arith.muli %55, %c16_i32_14 : i32
    %57 = tpu.assume_multiple %56, 8 : i32
    %58 = arith.addi %53, %57 : i32
    %c0_15 = arith.constant 0 : index
    %59 = arith.index_cast %58 : i32 to index
    %c0_16 = arith.constant 0 : index
    %60 = vector.load %arg3[%c0_15, %59, %c0_16] : memref<1x16x64xf32, #tpu.memory_space<vmem>>, vector<1x16x64xf32>
    %61 = vector.shape_cast %60 : vector<1x16x64xf32> to vector<16x64xf32>
    %cst_17 = arith.constant dense<0.000000e+00> : vector<16x64xf32>
    %62 = tpu.matmul %61, %5, %cst_17 {dimension_numbers = #tpu.dot_dimension_numbers<[1], [0], [0], [1], [0, 0, 1, 1], [], []>} : vector<16x64xf32>, vector<64x64xf32>, vector<16x64xf32> -> vector<16x64xf32>
    %63 = vector.extract_strided_slice %62 {offsets = [0, 0], sizes = [16, 8], strides = [1, 1]} : vector<16x64xf32> to vector<16x8xf32>
    %64 = vector.extract_strided_slice %62 {offsets = [0, 8], sizes = [16, 8], strides = [1, 1]} : vector<16x64xf32> to vector<16x8xf32>
    %65 = vector.extract_strided_slice %62 {offsets = [0, 16], sizes = [16, 8], strides = [1, 1]} : vector<16x64xf32> to vector<16x8xf32>
    %66 = vector.extract_strided_slice %62 {offsets = [0, 24], sizes = [16, 8], strides = [1, 1]} : vector<16x64xf32> to vector<16x8xf32>
    %67 = vector.extract_strided_slice %62 {offsets = [0, 32], sizes = [16, 8], strides = [1, 1]} : vector<16x64xf32> to vector<16x8xf32>
    %68 = vector.extract_strided_slice %62 {offsets = [0, 40], sizes = [16, 8], strides = [1, 1]} : vector<16x64xf32> to vector<16x8xf32>
    %69 = vector.extract_strided_slice %62 {offsets = [0, 48], sizes = [16, 8], strides = [1, 1]} : vector<16x64xf32> to vector<16x8xf32>
    %70 = vector.extract_strided_slice %62 {offsets = [0, 56], sizes = [16, 8], strides = [1, 1]} : vector<16x64xf32> to vector<16x8xf32>
    %71 = vector.shape_cast %63 : vector<16x8xf32> to vector<1x16x8xf32>
    %72 = vector.shape_cast %64 : vector<16x8xf32> to vector<1x16x8xf32>
    %73 = vector.shape_cast %65 : vector<16x8xf32> to vector<1x16x8xf32>
    %74 = vector.shape_cast %66 : vector<16x8xf32> to vector<1x16x8xf32>
    %75 = vector.shape_cast %67 : vector<16x8xf32> to vector<1x16x8xf32>
    %76 = vector.shape_cast %68 : vector<16x8xf32> to vector<1x16x8xf32>
    %77 = vector.shape_cast %69 : vector<16x8xf32> to vector<1x16x8xf32>
    %78 = vector.shape_cast %70 : vector<16x8xf32> to vector<1x16x8xf32>
    %79 = tpu.concatenate %71, %72, %73, %74, %75, %76, %77, %78 in 0 : vector<1x16x8xf32>, vector<1x16x8xf32>, vector<1x16x8xf32>, vector<1x16x8xf32>, vector<1x16x8xf32>, vector<1x16x8xf32>, vector<1x16x8xf32>, vector<1x16x8xf32> -> vector<8x16x8xf32>
    "tpu.trace_start"() <{level = 10 : i32, message = "gqd,gkd->gqk"}> : () -> ()
    %cst_18 = arith.constant dense<0.000000e+00> : vector<8x16x16xf32>
    %80 = tpu.matmul %79, %35, %cst_18 {dimension_numbers = #tpu.dot_dimension_numbers<[2], [2], [1], [1], [0, 0, 0, 1, 1, 1], [0], [0]>} : vector<8x16x8xf32>, vector<8x16x8xf32>, vector<8x16x16xf32> -> vector<8x16x16xf32>
    "tpu.trace_stop"() : () -> ()
    %cst_19 = arith.constant dense<0xFF800000> : vector<8x16xf32>
    %81 = vector.multi_reduction <maximumf>, %80, %cst_19 [2] : vector<8x16x16xf32> to vector<8x16xf32>
    %82 = vector.shape_cast %81 : vector<8x16xf32> to vector<8x16x1xf32>
    %83 = vector.broadcast %82 : vector<8x16x1xf32> to vector<8x16x16xf32>
    %84 = arith.subf %80, %83 : vector<8x16x16xf32>
    %85 = math.exp %84 : vector<8x16x16xf32>
    %cst_20 = arith.constant dense<0.000000e+00> : vector<8x16xf32>
    %86 = vector.multi_reduction <add>, %85, %cst_20 [2] : vector<8x16x16xf32> to vector<8x16xf32>
    %87 = vector.shape_cast %86 : vector<8x16xf32> to vector<8x16x1xf32>
    "tpu.trace_start"() <{level = 10 : i32, message = "gqk,gkd->gqd"}> : () -> ()
    %cst_21 = arith.constant dense<0.000000e+00> : vector<8x16x8xf32>
    %88 = tpu.matmul %85, %52, %cst_21 {dimension_numbers = #tpu.dot_dimension_numbers<[2], [1], [1], [2], [0, 0, 0, 1, 1, 2], [0], [0]>} : vector<8x16x16xf32>, vector<8x16x8xf32>, vector<8x16x8xf32> -> vector<8x16x8xf32>
    "tpu.trace_stop"() : () -> ()
    %89 = tpu.reciprocal %87 : vector<8x16x1xf32> -> vector<8x16x1xf32>
    %90 = vector.broadcast %89 : vector<8x16x1xf32> to vector<8x16x8xf32>
    %91 = arith.mulf %88, %90 : vector<8x16x8xf32>
    %92 = vector.extract_strided_slice %91 {offsets = [0, 0, 0], sizes = [1, 16, 8], strides = [1, 1, 1]} : vector<8x16x8xf32> to vector<1x16x8xf32>
    %93 = vector.shape_cast %92 : vector<1x16x8xf32> to vector<16x8xf32>
    %94 = vector.extract_strided_slice %91 {offsets = [1, 0, 0], sizes = [1, 16, 8], strides = [1, 1, 1]} : vector<8x16x8xf32> to vector<1x16x8xf32>
    %95 = vector.shape_cast %94 : vector<1x16x8xf32> to vector<16x8xf32>
    %96 = vector.extract_strided_slice %91 {offsets = [2, 0, 0], sizes = [1, 16, 8], strides = [1, 1, 1]} : vector<8x16x8xf32> to vector<1x16x8xf32>
    %97 = vector.shape_cast %96 : vector<1x16x8xf32> to vector<16x8xf32>
    %98 = vector.extract_strided_slice %91 {offsets = [3, 0, 0], sizes = [1, 16, 8], strides = [1, 1, 1]} : vector<8x16x8xf32> to vector<1x16x8xf32>
    %99 = vector.shape_cast %98 : vector<1x16x8xf32> to vector<16x8xf32>
    %100 = vector.extract_strided_slice %91 {offsets = [4, 0, 0], sizes = [1, 16, 8], strides = [1, 1, 1]} : vector<8x16x8xf32> to vector<1x16x8xf32>
    %101 = vector.shape_cast %100 : vector<1x16x8xf32> to vector<16x8xf32>
    %102 = vector.extract_strided_slice %91 {offsets = [5, 0, 0], sizes = [1, 16, 8], strides = [1, 1, 1]} : vector<8x16x8xf32> to vector<1x16x8xf32>
    %103 = vector.shape_cast %102 : vector<1x16x8xf32> to vector<16x8xf32>
    %104 = vector.extract_strided_slice %91 {offsets = [6, 0, 0], sizes = [1, 16, 8], strides = [1, 1, 1]} : vector<8x16x8xf32> to vector<1x16x8xf32>
    %105 = vector.shape_cast %104 : vector<1x16x8xf32> to vector<16x8xf32>
    %106 = vector.extract_strided_slice %91 {offsets = [7, 0, 0], sizes = [1, 16, 8], strides = [1, 1, 1]} : vector<8x16x8xf32> to vector<1x16x8xf32>
    %107 = vector.shape_cast %106 : vector<1x16x8xf32> to vector<16x8xf32>
    %108 = tpu.concatenate %93, %95, %97, %99, %101, %103, %105, %107 in 1 : vector<16x8xf32>, vector<16x8xf32>, vector<16x8xf32>, vector<16x8xf32>, vector<16x8xf32>, vector<16x8xf32>, vector<16x8xf32>, vector<16x8xf32> -> vector<16x64xf32>
    %109 = arith.index_cast %57 : i32 to index
    %c0_22 = arith.constant 0 : index
    %110 = vector.load %arg10[%109, %c0_22] : memref<16x64xf32, #tpu.memory_space<vmem>>, vector<16x64xf32>
    %cst_23 = arith.constant dense<0.000000e+00> : vector<16x64xf32>
    %111 = tpu.matmul %108, %14, %cst_23 {dimension_numbers = #tpu.dot_dimension_numbers<[1], [0], [0], [1], [0, 0, 1, 1], [], []>} : vector<16x64xf32>, vector<64x64xf32>, vector<16x64xf32> -> vector<16x64xf32>
    %112 = arith.addf %110, %111 : vector<16x64xf32>
    %113 = arith.index_cast %57 : i32 to index
    %c0_24 = arith.constant 0 : index
    %114 = vector.load %arg10[%113, %c0_24] : memref<16x64xf32, #tpu.memory_space<vmem>>, vector<16x64xf32>
    tpu.vector_store %arg10[%113, %c0_24], %112 {strides = array<i32>} : memref<16x64xf32, #tpu.memory_space<vmem>>, vector<16x64xf32>,
    %c1_i32_25 = arith.constant 1 : i32
    %c0_i32_26 = arith.constant 0 : i32
    %115 = arith.cmpi eq, %arg2, %c0_i32_26 : i32
    %116 = arith.extui %115 : i1 to i32
    %c0_i32_27 = arith.constant 0 : i32
    %117 = arith.cmpi ne, %116, %c0_i32_27 : i32
    scf.if %117 {
      %c0_28 = arith.constant 0 : index
      %c0_29 = arith.constant 0 : index
      %118 = vector.load %arg10[%c0_28, %c0_29] : memref<16x64xf32, #tpu.memory_space<vmem>>, vector<16x64xf32>
      %c0_30 = arith.constant 0 : index
      %c0_31 = arith.constant 0 : index
      %119 = vector.load %arg8[%c0_30, %c0_31] : memref<1x64xf32, #tpu.memory_space<vmem>>, vector<1x64xf32>
      %120 = vector.broadcast %119 : vector<1x64xf32> to vector<16x64xf32>
      %121 = arith.addf %118, %120 : vector<16x64xf32>
      %c0_32 = arith.constant 0 : index
      %c0_33 = arith.constant 0 : index
      %c0_34 = arith.constant 0 : index
      %122 = vector.load %arg9[%c0_32, %c0_33, %c0_34] : memref<1x16x64xf32, #tpu.memory_space<vmem>>, vector<1x16x64xf32>
      %123 = vector.shape_cast %122 : vector<1x16x64xf32> to vector<16x64xf32>
      %124 = vector.shape_cast %121 : vector<16x64xf32> to vector<1x16x64xf32>
      tpu.vector_store %arg9[%c0_32, %c0_33, %c0_34], %124 {strides = array<i32>} : memref<1x16x64xf32, #tpu.memory_space<vmem>>, vector<1x16x64xf32>,
    } else {
    }
    return
  }
  func.func @transform_0(%arg0: i32, %arg1: i32, %arg2: i32) -> (i32, i32, i32) {
    %c0_i32 = arith.constant 0 : i32
    %c0_i32_0 = arith.constant 0 : i32
    %c0_i32_1 = arith.constant 0 : i32
    return %arg0, %c0_i32, %c0_i32_0 : i32, i32, i32
  }
  func.func @transform_1(%arg0: i32, %arg1: i32, %arg2: i32) -> (i32, i32, i32) {
    %c0_i32 = arith.constant 0 : i32
    %c0_i32_0 = arith.constant 0 : i32
    %c0_i32_1 = arith.constant 0 : i32
    %c0_i32_2 = arith.constant 0 : i32
    return %c0_i32, %c0_i32_0, %c0_i32_1 : i32, i32, i32
  }
  func.func @transform_2(%arg0: i32, %arg1: i32, %arg2: i32) -> (i32, i32, i32) {
    %c0_i32 = arith.constant 0 : i32
    %c0_i32_0 = arith.constant 0 : i32
    %c0_i32_1 = arith.constant 0 : i32
    %c0_i32_2 = arith.constant 0 : i32
    return %c0_i32, %c0_i32_0, %c0_i32_1 : i32, i32, i32
  }
  func.func @transform_3(%arg0: i32, %arg1: i32, %arg2: i32) -> (i32, i32, i32) {
    %c0_i32 = arith.constant 0 : i32
    %c0_i32_0 = arith.constant 0 : i32
    %c0_i32_1 = arith.constant 0 : i32
    %c0_i32_2 = arith.constant 0 : i32
    return %c0_i32, %c0_i32_0, %c0_i32_1 : i32, i32, i32
  }
  func.func @transform_4(%arg0: i32, %arg1: i32, %arg2: i32) -> (i32, i32, i32) {
    %c0_i32 = arith.constant 0 : i32
    %c0_i32_0 = arith.constant 0 : i32
    %c0_i32_1 = arith.constant 0 : i32
    %c0_i32_2 = arith.constant 0 : i32
    return %c0_i32, %c0_i32_0, %c0_i32_1 : i32, i32, i32
  }
  func.func @transform_5(%arg0: i32, %arg1: i32, %arg2: i32) -> (i32, i32) {
    %c0_i32 = arith.constant 0 : i32
    %c0_i32_0 = arith.constant 0 : i32
    %c0_i32_1 = arith.constant 0 : i32
    return %c0_i32, %c0_i32_0 : i32, i32
  }
  func.func @transform_6(%arg0: i32, %arg1: i32, %arg2: i32) -> (i32, i32, i32) {
    %c0_i32 = arith.constant 0 : i32
    %c0_i32_0 = arith.constant 0 : i32
    return %arg0, %arg1, %c0_i32 : i32, i32, i32
  }
}

</mosaic_0001>

<llo_original>
// kernel: tpu_custom_call.1
$region0: #{tpu_custom_call.1}
  #allocation0 [shape = 'u32[]', space=smem, size = 0x4, offset = 0x4, fixed_abs, tag = 'smem constant byte address 0x4 - core index']
  #allocation1 [shape = 'u32[72,128]{1,0:T(1,128)}', space=vmem, size = 0x9000, scoped, tag = 'internal scratch']
  #allocation2 [shape = 'f32[16,64]{1,0:T(8,128)}', space=vmem, size = 0x2000, scoped, tag = 'scratch operand']
  %s0 = inlined_call_operand.hbm [shape: f32[2,16,64], index: 0, kind: input, shape index: {}]
  %s1 = inlined_call_operand.hbm [shape: f32[1,64,64], index: 1, kind: input, shape index: {}]
  %s2 = inlined_call_operand.hbm [shape: f32[1,64,64], index: 2, kind: input, shape index: {}]
  %s3 = inlined_call_operand.hbm [shape: f32[1,64,64], index: 3, kind: input, shape index: {}]
  %s4 = inlined_call_operand.hbm [shape: f32[1,64,64], index: 4, kind: input, shape index: {}]
  %s5 = inlined_call_operand.vmem [shape: f32[1,64], index: 5, kind: input, shape index: {}]
  %s6 = inlined_call_operand.hbm [shape: f32[2,16,64], index: 6, kind: output, shape index: {}]
  %s7 = sld [smem:[#allocation0]]
  $region85: #{tpu_custom_call.1} parent=0
    _
  %s9 = ssub.s32 1, %s7
  %s10 = scalar_select 0, %s9, %s7
  $region1: #{tpu_custom_call.1} parent=0
    #allocation3 [shape = 'u8[16384]{0}', space=vmem, size = 0x4000, scoped, tag = 'input window, operand 0']
    #allocation4 [shape = 's32[2]{0}', space=sflag, size = 0x8, scoped, tag = 'scoped memory for tpu_custom_call.1']
    #allocation5 [shape = 's32[2]{0}', space=sflag, size = 0x8, scoped, tag = 'scoped memory for tpu_custom_call.1']
    #allocation6 [shape = 'u8[32768]{0}', space=vmem, size = 0x8000, scoped, tag = 'input window, operand 1, single buffered']
    #allocation7 [shape = 's32[1]{0}', space=sflag, size = 0x4, scoped, tag = 'scoped memory for tpu_custom_call.1']
    #allocation8 [shape = 'u8[32768]{0}', space=vmem, size = 0x8000, scoped, tag = 'input window, operand 2, single buffered']
    #allocation9 [shape = 'u8[32768]{0}', space=vmem, size = 0x8000, scoped, tag = 'input window, operand 3, single buffered']
    #allocation10 [shape = 's32[1]{0}', space=sflag, size = 0x4, scoped, tag = 'scoped memory for tpu_custom_call.1']
    #allocation11 [shape = 'u8[32768]{0}', space=vmem, size = 0x8000, scoped, tag = 'input window, operand 4, single buffered']
    #allocation12 [shape = 'u8[16384]{0}', space=vmem, size = 0x4000, scoped, tag = 'output window, operand 0']
    %11 = vsyncpa [#allocation4], 0
    %s12 = scalar_lea.sflag [#allocation4], 1
    %13 = vsyncpa %s12, 0
    %14 = vsyncpa [#allocation7], 0
    %15 = vsyncpa [#allocation10], 0
    %16 = vsyncpa [#allocation5], 0
    %s17 = scalar_lea.sflag [#allocation5], 1
    %18 = vsyncpa %s17, 0
    loop: start=0, step=1, limit=4
    $region2: #{tpu_custom_call.1} parent=1 // loop_pre_header
      _
    $region3: #{tpu_custom_call.1} parent=1 // loop_header
      %s20 = sphi 0, %s24
      %p21 = scmp.ge.s32.totalorder %s20, 4
      %s27 = sphi 0, %s46
      %s28 = sphi 0, %s42
      %s29 = sphi 0, %s38
      %s30 = sphi 0, %s27
      %s31 = sphi 0, %s28
      %s32 = sphi 0, %s29
      %s33 = sphi 0, %s30
      %s34 = sphi 0, %s31
      %s35 = sphi 0, %s32
      %s49 = sphi 0, %s51
      %s52 = sphi 0, %s49
      %s53 = sphi 0, %s52
      %s69 = sphi 0, %s53
      %s73 = sphi 0, %s73
      %s75 = sphi 0, %s73
      %s76 = sphi 0, %s75
      %s90 = sphi 0, %s76
      %s94 = sphi 0, %s94
      %s96 = sphi 0, %s94
      %s97 = sphi 0, %s96
      %s111 = sphi 0, %s97
      %s115 = sphi 0, %s115
      %s117 = sphi 0, %s115
      %s118 = sphi 0, %s117
      %s132 = sphi 0, %s118
      %s136 = sphi 0, %s136
      %s138 = sphi 0, %s136
      %s139 = sphi 0, %s138
      %s153 = sphi 0, %s139
      %s157 = sphi 0, %s157
      %s159 = sphi 0, %s157
      %s160 = sphi 0, %s159
      %s174 = sphi 0, %s160
      %s182 = sphi 0, %s184
      %s185 = sphi 0, %s182
      %s186 = sphi 0, %s185
      %s202 = sphi 0, %s186
    $region4: #{tpu_custom_call.1} parent=1 // loop_header_branch
      %23 = sbr.rel (%p21) target = $region8
    $region5: #{tpu_custom_call.1} parent=1 // loop_body
      %s25 = ssub.s32 %s20, 1
      %s26 = ssub.s32 %s20, 2
      %s36 = sadd.s32 1, %s29
      %p37 = scmp.ge.s32.totalorder %s36, 1
      %s38 = scalar_select %p37, 0, %s36
      %s39 = sadd.s32 1, %s28
      %s40 = scalar_select %p37, %s39, %s28
      %p41 = scmp.ge.s32.totalorder %s40, 1
      %s42 = scalar_select %p41, 0, %s40
      %s43 = sadd.s32 1, %s27
      %s44 = scalar_select %p41, %s43, %s27
      %p45 = scmp.ge.s32.totalorder %s44, 2
      %s46 = scalar_select %p45, 0, %s44
      %s47 = ssub.s32 %s27, %s46
      %p48 = scmp.eq.s32.totalorder %s47, 0
      %s50 = sadd.s32 %s49, 1
      %s51 = scalar_select %p48, %s49, %s50
      %p54 = pneg %p48
      %p55 = scmp.eq.s32.totalorder %s20, 1
      %p56 = por %p54, %p55
      %p57 = scmp.ne.s32.totalorder %s49, %s52
      %p58 = scmp.eq.s32.totalorder %s20, 0
      %p59 = por %p57, %p58
      %p60 = scmp.ne.s32.totalorder %s49, %s52
      %p61 = scmp.eq.s32.totalorder %s25, 1
      %p62 = por %p60, %p61
      %p63 = scmp.ne.s32.totalorder %s52, %s53
      %p64 = scmp.eq.s32.totalorder %s25, 0
      %p65 = por %p63, %p64
      %p66 = scmp.ne.s32.totalorder %s52, %s53
      %p67 = scmp.eq.s32.totalorder %s26, 1
      %p68 = por %p66, %p67
      %p70 = scmp.ne.s32.totalorder %s53, %s69
      %p71 = scmp.eq.s32.totalorder %s26, 0
      %p72 = por %p70, %p71
      %s74 = sadd.s32 %s73, 1
      %p77 = scmp.eq.s32.totalorder %s20, 1
      %p78 = scmp.ne.s32.totalorder %s73, %s75
      %p79 = scmp.eq.s32.totalorder %s20, 0
      %p80 = por %p78, %p79
      %p81 = scmp.ne.s32.totalorder %s73, %s75
      %p82 = scmp.eq.s32.totalorder %s25, 1
      %p83 = por %p81, %p82
      %p84 = scmp.ne.s32.totalorder %s75, %s76
      %p85 = scmp.eq.s32.totalorder %s25, 0
      %p86 = por %p84, %p85
      %p87 = scmp.ne.s32.totalorder %s75, %s76
      %p88 = scmp.eq.s32.totalorder %s26, 1
      %p89 = por %p87, %p88
      %p91 = scmp.ne.s32.totalorder %s76, %s90
      %p92 = scmp.eq.s32.totalorder %s26, 0
      %p93 = por %p91, %p92
      %s95 = sadd.s32 %s94, 1
      %p98 = scmp.eq.s32.totalorder %s20, 1
      %p99 = scmp.ne.s32.totalorder %s94, %s96
      %p100 = scmp.eq.s32.totalorder %s20, 0
      %p101 = por %p99, %p100
      %p102 = scmp.ne.s32.totalorder %s94, %s96
      %p103 = scmp.eq.s32.totalorder %s25, 1
      %p104 = por %p102, %p103
      %p105 = scmp.ne.s32.totalorder %s96, %s97
      %p106 = scmp.eq.s32.totalorder %s25, 0
      %p107 = por %p105, %p106
      %p108 = scmp.ne.s32.totalorder %s96, %s97
      %p109 = scmp.eq.s32.totalorder %s26, 1
      %p110 = por %p108, %p109
      %p112 = scmp.ne.s32.totalorder %s97, %s111
      %p113 = scmp.eq.s32.totalorder %s26, 0
      %p114 = por %p112, %p113
      %s116 = sadd.s32 %s115, 1
      %p119 = scmp.eq.s32.totalorder %s20, 1
      %p120 = scmp.ne.s32.totalorder %s115, %s117
      %p121 = scmp.eq.s32.totalorder %s20, 0
      %p122 = por %p120, %p121
      %p123 = scmp.ne.s32.totalorder %s115, %s117
      %p124 = scmp.eq.s32.totalorder %s25, 1
      %p125 = por %p123, %p124
      %p126 = scmp.ne.s32.totalorder %s117, %s118
      %p127 = scmp.eq.s32.totalorder %s25, 0
      %p128 = por %p126, %p127
      %p129 = scmp.ne.s32.totalorder %s117, %s118
      %p130 = scmp.eq.s32.totalorder %s26, 1
      %p131 = por %p129, %p130
      %p133 = scmp.ne.s32.totalorder %s118, %s132
      %p134 = scmp.eq.s32.totalorder %s26, 0
      %p135 = por %p133, %p134
      %s137 = sadd.s32 %s136, 1
      %p140 = scmp.eq.s32.totalorder %s20, 1
      %p141 = scmp.ne.s32.totalorder %s136, %s138
      %p142 = scmp.eq.s32.totalorder %s20, 0
      %p143 = por %p141, %p142
      %p144 = scmp.ne.s32.totalorder %s136, %s138
      %p145 = scmp.eq.s32.totalorder %s25, 1
      %p146 = por %p144, %p145
      %p147 = scmp.ne.s32.totalorder %s138, %s139
      %p148 = scmp.eq.s32.totalorder %s25, 0
      %p149 = por %p147, %p148
      %p150 = scmp.ne.s32.totalorder %s138, %s139
      %p151 = scmp.eq.s32.totalorder %s26, 1
      %p152 = por %p150, %p151
      %p154 = scmp.ne.s32.totalorder %s139, %s153
      %p155 = scmp.eq.s32.totalorder %s26, 0
      %p156 = por %p154, %p155
      %s158 = sadd.s32 %s157, 1
      %p161 = scmp.eq.s32.totalorder %s20, 1
      %p162 = scmp.ne.s32.totalorder %s157, %s159
      %p163 = scmp.eq.s32.totalorder %s20, 0
      %p164 = por %p162, %p163
      %p165 = scmp.ne.s32.totalorder %s157, %s159
      %p166 = scmp.eq.s32.totalorder %s25, 1
      %p167 = por %p165, %p166
      %p168 = scmp.ne.s32.totalorder %s159, %s160
      %p169 = scmp.eq.s32.totalorder %s25, 0
      %p170 = por %p168, %p169
      %p171 = scmp.ne.s32.totalorder %s159, %s160
      %p172 = scmp.eq.s32.totalorder %s26, 1
      %p173 = por %p171, %p172
      %p175 = scmp.ne.s32.totalorder %s160, %s174
      %p176 = scmp.eq.s32.totalorder %s26, 0
      %p177 = por %p175, %p176
      %s178 = ssub.s32 %s27, %s46
      %s179 = ssub.s32 %s28, %s42
      %s180 = sor.u32 %s178, %s179
      %p181 = scmp.eq.s32.totalorder %s180, 0
      %s183 = sadd.s32 %s182, 1
      %s184 = scalar_select %p181, %s182, %s183
      %p187 = pneg %p181
      %p188 = scmp.eq.s32.totalorder %s20, 1
      %p189 = por %p187, %p188
      %p190 = scmp.ne.s32.totalorder %s182, %s185
      %p191 = scmp.eq.s32.totalorder %s20, 0
      %p192 = por %p190, %p191
      %p193 = scmp.ne.s32.totalorder %s182, %s185
      %p194 = scmp.eq.s32.totalorder %s25, 1
      %p195 = por %p193, %p194
      %p196 = scmp.ne.s32.totalorder %s185, %s186
      %p197 = scmp.eq.s32.totalorder %s25, 0
      %p198 = por %p196, %p197
      %p199 = scmp.ne.s32.totalorder %s185, %s186
      %p200 = scmp.eq.s32.totalorder %s26, 1
      %p201 = por %p199, %p200
      %p203 = scmp.ne.s32.totalorder %s186, %s202
      %p204 = scmp.eq.s32.totalorder %s26, 0
      %p205 = por %p203, %p204
      %p206 = scmp.le.s32.totalorder 1, %s20
      %p207 = scmp.lt.s32.totalorder %s20, 3
      %p208 = pnand %p206, %p207
      %p209 = pneg %p208
      // Predicated region
      $region9: #{tpu_custom_call.1} parent=5 // pred_check
        _
      $region10: #{tpu_custom_call.1} parent=5 // pred_check_branch
        %211 = sbr.rel (%p208) target = $region12
      $region11: #{tpu_custom_call.1} parent=5 // pred_region
        %s212 = ssub.s32 %s20, 1
        // Predicated region
        $region13: #{tpu_custom_call.1} parent=11 // pred_check
          %p213 = pneg %p86
        $region14: #{tpu_custom_call.1} parent=11 // pred_check_branch
          %215 = sbr.rel (%p213) target = $region16
        $region15: #{tpu_custom_call.1} parent=11 // pred_region
          %217 = vsyncadd [#allocation7], 0
          %s218 = sshll.u32 %s1, 4
          %s219 = int_to_ptr.hbm [resolvable:$true] %s218
          %s220 = sshll.u32 [#allocation6], 4
          %s221 = int_to_ptr.vmem [resolvable:$true] %s220
          %226 = dma.hbm_to_vmem [thread:$0]  %s219, 1024, %s221, [#allocation7], 128, 128, 8
        $region16: #{tpu_custom_call.1} parent=11 // pred_fallthru
          _
        // Predicated region
        $region17: #{tpu_custom_call.1} parent=11 // pred_check
          %p227 = pneg %p107
        $region18: #{tpu_custom_call.1} parent=11 // pred_check_branch
          %229 = sbr.rel (%p227) target = $region20
        $region19: #{tpu_custom_call.1} parent=11 // pred_region
          %231 = vsyncadd [#allocation7], 0
          %s232 = sshll.u32 %s2, 4
          %s233 = int_to_ptr.hbm [resolvable:$true] %s232
          %s234 = sshll.u32 [#allocation8], 4
          %s235 = int_to_ptr.vmem [resolvable:$true] %s234
          %240 = dma.hbm_to_vmem [thread:$0]  %s233, 1024, %s235, [#allocation7], 128, 128, 8
        $region20: #{tpu_custom_call.1} parent=11 // pred_fallthru
          _
        // Predicated region
        $region21: #{tpu_custom_call.1} parent=11 // pred_check
          %p241 = pneg %p128
        $region22: #{tpu_custom_call.1} parent=11 // pred_check_branch
          %243 = sbr.rel (%p241) target = $region24
        $region23: #{tpu_custom_call.1} parent=11 // pred_region
          %245 = vsyncadd [#allocation10], 0
          %s246 = sshll.u32 %s3, 4
          %s247 = int_to_ptr.hbm [resolvable:$true] %s246
          %s248 = sshll.u32 [#allocation9], 4
          %s249 = int_to_ptr.vmem [resolvable:$true] %s248
          %254 = dma.hbm_to_vmem [thread:$0]  %s247, 1024, %s249, [#allocation10], 128, 128, 8
        $region24: #{tpu_custom_call.1} parent=11 // pred_fallthru
          _
        // Predicated region
        $region25: #{tpu_custom_call.1} parent=11 // pred_check
          %p255 = pneg %p149
        $region26: #{tpu_custom_call.1} parent=11 // pred_check_branch
          %257 = sbr.rel (%p255) target = $region28
        $region27: #{tpu_custom_call.1} parent=11 // pred_region
          %259 = vsyncadd [#allocation10], 0
          %s260 = sshll.u32 %s4, 4
          %s261 = int_to_ptr.hbm [resolvable:$true] %s260
          %s262 = sshll.u32 [#allocation11], 4
          %s263 = int_to_ptr.vmem [resolvable:$true] %s262
          %268 = dma.hbm_to_vmem [thread:$0]  %s261, 1024, %s263, [#allocation10], 128, 128, 8
        $region28: #{tpu_custom_call.1} parent=11 // pred_fallthru
          _
        // Predicated region
        $region29: #{tpu_custom_call.1} parent=11 // pred_check
          %p269 = pneg %p170
        $region30: #{tpu_custom_call.1} parent=11 // pred_check_branch
          %271 = sbr.rel (%p269) target = $region32
        $region31: #{tpu_custom_call.1} parent=11 // pred_region
          _
        $region32: #{tpu_custom_call.1} parent=11 // pred_fallthru
          _
      $region12: #{tpu_custom_call.1} parent=5 // pred_fallthru
        _
      %p272 = scmp.lt.s32.totalorder %s20, 2
      // Predicated region
      $region33: #{tpu_custom_call.1} parent=5 // pred_check
        %p273 = pneg %p272
      $region34: #{tpu_custom_call.1} parent=5 // pred_check_branch
        %275 = sbr.rel (%p273) target = $region36
      $region35: #{tpu_custom_call.1} parent=5 // pred_region
        // Predicated region
        $region37: #{tpu_custom_call.1} parent=35 // pred_check
          %p276 = pneg %p59
        $region38: #{tpu_custom_call.1} parent=35 // pred_check_branch
          %278 = sbr.rel (%p276) target = $region40
        $region39: #{tpu_custom_call.1} parent=35 // pred_region
          %s279 = sand.u32 %s49, 1
          %s280 = scalar_lea.sflag [#allocation4], %s279
          %s281 = sand.u32 %s49, 1
          %s282 = smul.addr %s281, 16
          %s283 = scalar_lea.vmem [#allocation3], %s282
          %285 = vsyncadd %s280, 0
          %s286 = smul.addr %s27, 2
          %s287 = smul.addr %s286, 8
          %s288 = scalar_lea.hbm %s0, %s287
          %s289 = sshll.u32 %s288, 4
          %s290 = int_to_ptr.hbm [resolvable:$true] %s289
          %s291 = sshll.u32 %s283, 4
          %s292 = int_to_ptr.vmem [resolvable:$true] %s291
          %297 = dma.hbm_to_vmem [thread:$0]  %s290, 256, %s292, %s280, 128, 128, 8
        $region40: #{tpu_custom_call.1} parent=35 // pred_fallthru
          _
      $region36: #{tpu_custom_call.1} parent=5 // pred_fallthru
        _
      %p298 = scmp.le.s32.totalorder 1, %s20
      %p299 = scmp.lt.s32.totalorder %s20, 3
      %p300 = pnand %p298, %p299
      %p301 = pneg %p300
      // Predicated region
      $region41: #{tpu_custom_call.1} parent=5 // pred_check
        _
      $region42: #{tpu_custom_call.1} parent=5 // pred_check_branch
        %303 = sbr.rel (%p300) target = $region44
      $region43: #{tpu_custom_call.1} parent=5 // pred_region
        %s304 = ssub.s32 %s20, 1
        %s305 = sand.u32 %s52, 1
        %s306 = scalar_lea.sflag [#allocation4], %s305
        %s307 = sand.u32 %s52, 1
        %s308 = smul.addr %s307, 16
        %s309 = scalar_lea.vmem [#allocation3], %s308
        // Predicated region
        $region45: #{tpu_custom_call.1} parent=43 // pred_check
          %p310 = pneg %p65
        $region46: #{tpu_custom_call.1} parent=43 // pred_check_branch
          %312 = sbr.rel (%p310) target = $region48
        $region47: #{tpu_custom_call.1} parent=43 // pred_region
          %314 = dma.done %s306, 256
        $region48: #{tpu_custom_call.1} parent=43 // pred_fallthru
          _
        // Predicated region
        $region49: #{tpu_custom_call.1} parent=43 // pred_check
          %p315 = pneg %p86
        $region50: #{tpu_custom_call.1} parent=43 // pred_check_branch
          %317 = sbr.rel (%p315) target = $region52
        $region51: #{tpu_custom_call.1} parent=43 // pred_region
          %319 = dma.done [#allocation7], 1024
        $region52: #{tpu_custom_call.1} parent=43 // pred_fallthru
          _
        // Predicated region
        $region53: #{tpu_custom_call.1} parent=43 // pred_check
          %p320 = pneg %p107
        $region54: #{tpu_custom_call.1} parent=43 // pred_check_branch
          %322 = sbr.rel (%p320) target = $region56
        $region55: #{tpu_custom_call.1} parent=43 // pred_region
          %324 = dma.done [#allocation7], 1024
        $region56: #{tpu_custom_call.1} parent=43 // pred_fallthru
          _
        // Predicated region
        $region57: #{tpu_custom_call.1} parent=43 // pred_check
          %p325 = pneg %p128
        $region58: #{tpu_custom_call.1} parent=43 // pred_check_branch
          %327 = sbr.rel (%p325) target = $region60
        $region59: #{tpu_custom_call.1} parent=43 // pred_region
          %329 = dma.done [#allocation10], 1024
        $region60: #{tpu_custom_call.1} parent=43 // pred_fallthru
          _
        // Predicated region
        $region61: #{tpu_custom_call.1} parent=43 // pred_check
          %p330 = pneg %p149
        $region62: #{tpu_custom_call.1} parent=43 // pred_check_branch
          %332 = sbr.rel (%p330) target = $region64
        $region63: #{tpu_custom_call.1} parent=43 // pred_region
          %334 = dma.done [#allocation10], 1024
        $region64: #{tpu_custom_call.1} parent=43 // pred_fallthru
          _
        %s335 = sand.u32 %s52, 1
        %s336 = scalar_lea.sflag [#allocation4], %s335
        %s337 = sand.u32 %s52, 1
        %s338 = smul.addr %s337, 16
        %s339 = scalar_lea.vmem [#allocation3], %s338
        %p340 = pneg %p65
        %p341 = pneg %p62
        %p342 = pneg %p86
        %p343 = pneg %p83
        %p344 = pneg %p107
        %p345 = pneg %p104
        %p346 = pneg %p128
        %p347 = pneg %p125
        %p348 = pneg %p149
        %p349 = pneg %p146
        %p350 = pneg %p170
        %p351 = pneg %p167
        %p352 = pneg %p198
        %p353 = pneg %p195
        %s354 = sand.u32 %s185, 1
        %s355 = scalar_lea.sflag [#allocation5], %s354
        %s356 = sand.u32 %s185, 1
        %s357 = smul.addr %s356, 16
        %s358 = scalar_lea.vmem [#allocation12], %s357
        %s359 = smul.u32 2, %s31
        %p360 = scmp.eq.s32.totalorder %s32, 0
        // Predicated region
        $region65: #{tpu_custom_call.1} parent=43 // pred_check
          %p361 = pneg %p360
        $region66: #{tpu_custom_call.1} parent=43 // pred_check_branch
          %363 = sbr.rel (%p361) target = $region68
        $region67: #{tpu_custom_call.1} parent=43 // pred_region
          %vm364 = vcmask 523264
          %365 = vst.msk [vmem:[#allocation2] sm:$0xff] %vm364, 0.0
          %366 = vst.msk [vmem:[#allocation2 + $0x8] sm:$0xff] %vm364, 0.0
        $region68: #{tpu_custom_call.1} parent=43 // pred_fallthru
          _
        %s367 = smul.u32 %s32, 64
        %s368 = scalar_lea.vmem [#allocation6], %s367
        %v369 = vld [vmem:[%s368] sm:$0xff]
        %v370 = vld [vmem:[%s368 + $0x8] sm:$0xff]
        %v371 = vld [vmem:[%s368 + $0x10] sm:$0xff]
        %v372 = vld [vmem:[%s368 + $0x18] sm:$0xff]
        %v373 = vld [vmem:[%s368 + $0x20] sm:$0xff]
        %v374 = vld [vmem:[%s368 + $0x28] sm:$0xff]
        %v375 = vld [vmem:[%s368 + $0x30] sm:$0xff]
        %v376 = vld [vmem:[%s368 + $0x38] sm:$0xff]
        %s377 = scalar_lea.vmem [#allocation8], %s367
        %v378 = vld [vmem:[%s377] sm:$0xff]
        %v379 = vld [vmem:[%s377 + $0x8] sm:$0xff]
        %v380 = vld [vmem:[%s377 + $0x10] sm:$0xff]
        %v381 = vld [vmem:[%s377 + $0x18] sm:$0xff]
        %v382 = vld [vmem:[%s377 + $0x20] sm:$0xff]
        %v383 = vld [vmem:[%s377 + $0x28] sm:$0xff]
        %v384 = vld [vmem:[%s377 + $0x30] sm:$0xff]
        %v385 = vld [vmem:[%s377 + $0x38] sm:$0xff]
        %s386 = scalar_lea.vmem [#allocation9], %s367
        %v387 = vld [vmem:[%s386] sm:$0xff]
        %v388 = vld [vmem:[%s386 + $0x8] sm:$0xff]
        %v389 = vld [vmem:[%s386 + $0x10] sm:$0xff]
        %v390 = vld [vmem:[%s386 + $0x18] sm:$0xff]
        %v391 = vld [vmem:[%s386 + $0x20] sm:$0xff]
        %v392 = vld [vmem:[%s386 + $0x28] sm:$0xff]
        %v393 = vld [vmem:[%s386 + $0x30] sm:$0xff]
        %v394 = vld [vmem:[%s386 + $0x38] sm:$0xff]
        %s395 = scalar_lea.vmem [#allocation11], %s367
        %v396 = vld [vmem:[%s395] sm:$0xff]
        %v397 = vld [vmem:[%s395 + $0x8] sm:$0xff]
        %v398 = vld [vmem:[%s395 + $0x10] sm:$0xff]
        %v399 = vld [vmem:[%s395 + $0x18] sm:$0xff]
        %v400 = vld [vmem:[%s395 + $0x20] sm:$0xff]
        %v401 = vld [vmem:[%s395 + $0x28] sm:$0xff]
        %v402 = vld [vmem:[%s395 + $0x30] sm:$0xff]
        %v403 = vld [vmem:[%s395 + $0x38] sm:$0xff]
        %v404 = vld [vmem:[%s309] sm:$0xff]
        %v405 = vld [vmem:[%s309 + $0x8] sm:$0xff]
        %vm406 = vcmask 523264
        %v408 = vsel %vm406, %v404, 0
        %v411 = vsel %vm406, %v405, 0
        %413 = vmatpush.msra.mxu0 0.0
        %414 = vmatpush.msra.mxu0 0.0
        %415 = vmatpush.msra.mxu0 0.0
        %416 = vmatpush.msra.mxu0 0.0
        %417 = vmatpush.msra.mxu0 0.0
        %418 = vmatpush.msra.mxu0 0.0
        %419 = vmatpush.msra.mxu0 0.0
        %420 = vmatpush.msra.mxu0 0.0
        %421 = vmatpush.msra.mxu0 %v385
        %422 = vmatpush.msra.mxu0 %v384
        %423 = vmatpush.msra.mxu0 %v383
        %424 = vmatpush.msra.mxu0 %v382
        %425 = vmatpush.msra.mxu0 %v381
        %426 = vmatpush.msra.mxu0 %v380
        %427 = vmatpush.msra.mxu0 %v379
        %428 = vmatpush.msra.mxu0 %v378
        %429 = vmatmul.f32.gmra.mxu0 %v408
        %v430 = vpop.f32.mrf.mxu0
        %v431 = vadd.f32 0.0, %v430
        %432 = vmatmul.f32.gmra.mxu0 %v411
        %v433 = vpop.f32.mrf.mxu0
        %v434 = vadd.f32 0.0, %v433
        %435 = vdwg.mxu0
        %436 = vmatpush.msra.mxu0 0.0
        %437 = vmatpush.msra.mxu0 0.0
        %438 = vmatpush.msra.mxu0 0.0
        %439 = vmatpush.msra.mxu0 0.0
        %440 = vmatpush.msra.mxu0 0.0
        %441 = vmatpush.msra.mxu0 0.0
        %442 = vmatpush.msra.mxu0 0.0
        %443 = vmatpush.msra.mxu0 0.0
        %444 = vmatpush.msra.mxu0 %v394
        %445 = vmatpush.msra.mxu0 %v393
        %446 = vmatpush.msra.mxu0 %v392
        %447 = vmatpush.msra.mxu0 %v391
        %448 = vmatpush.msra.mxu0 %v390
        %449 = vmatpush.msra.mxu0 %v389
        %450 = vmatpush.msra.mxu0 %v388
        %451 = vmatpush.msra.mxu0 %v387
        %452 = vmatmul.f32.gmra.mxu0 %v408
        %v453 = vpop.f32.mrf.mxu0
        %v454 = vadd.f32 0.0, %v453
        %455 = vmatmul.f32.gmra.mxu0 %v411
        %v456 = vpop.f32.mrf.mxu0
        %v457 = vadd.f32 0.0, %v456
        %458 = vdwg.mxu0
        %461 = vrot.lane.b32.xlu0 %v431, 120
        %v462 = vpop.permute.xlu0 %461
        %463 = vrot.lane.b32.xlu0 %v434, 120
        %v464 = vpop.permute.xlu0 %463
        %465 = vrot.lane.b32.xlu0 %v431, 112
        %v466 = vpop.permute.xlu0 %465
        %467 = vrot.lane.b32.xlu0 %v434, 112
        %v468 = vpop.permute.xlu0 %467
        %469 = vrot.lane.b32.xlu0 %v431, 104
        %v470 = vpop.permute.xlu0 %469
        %471 = vrot.lane.b32.xlu0 %v434, 104
        %v472 = vpop.permute.xlu0 %471
        %473 = vrot.lane.b32.xlu0 %v431, 96
        %v474 = vpop.permute.xlu0 %473
        %475 = vrot.lane.b32.xlu0 %v434, 96
        %v476 = vpop.permute.xlu0 %475
        %477 = vrot.lane.b32.xlu0 %v431, 88
        %v478 = vpop.permute.xlu0 %477
        %479 = vrot.lane.b32.xlu0 %v434, 88
        %v480 = vpop.permute.xlu0 %479
        %481 = vrot.lane.b32.xlu0 %v431, 80
        %v482 = vpop.permute.xlu0 %481
        %483 = vrot.lane.b32.xlu0 %v434, 80
        %v484 = vpop.permute.xlu0 %483
        %485 = vrot.lane.b32.xlu0 %v431, 72
        %v486 = vpop.permute.xlu0 %485
        %487 = vrot.lane.b32.xlu0 %v434, 72
        %v488 = vpop.permute.xlu0 %487
        %491 = vrot.lane.b32.xlu0 %v454, 120
        %v492 = vpop.permute.xlu0 %491
        %493 = vrot.lane.b32.xlu0 %v457, 120
        %v494 = vpop.permute.xlu0 %493
        %497 = vrot.lane.b32.xlu0 %v454, 112
        %v498 = vpop.permute.xlu0 %497
        %499 = vrot.lane.b32.xlu0 %v457, 112
        %v500 = vpop.permute.xlu0 %499
        %503 = vrot.lane.b32.xlu0 %v454, 104
        %v504 = vpop.permute.xlu0 %503
        %505 = vrot.lane.b32.xlu0 %v457, 104
        %v506 = vpop.permute.xlu0 %505
        %509 = vrot.lane.b32.xlu0 %v454, 96
        %v510 = vpop.permute.xlu0 %509
        %511 = vrot.lane.b32.xlu0 %v457, 96
        %v512 = vpop.permute.xlu0 %511
        %515 = vrot.lane.b32.xlu0 %v454, 88
        %v516 = vpop.permute.xlu0 %515
        %517 = vrot.lane.b32.xlu0 %v457, 88
        %v518 = vpop.permute.xlu0 %517
        %521 = vrot.lane.b32.xlu0 %v454, 80
        %v522 = vpop.permute.xlu0 %521
        %523 = vrot.lane.b32.xlu0 %v457, 80
        %v524 = vpop.permute.xlu0 %523
        %527 = vrot.lane.b32.xlu0 %v454, 72
        %v528 = vpop.permute.xlu0 %527
        %529 = vrot.lane.b32.xlu0 %v457, 72
        %v530 = vpop.permute.xlu0 %529
        %s533 = smul.u32 %s31, 16
        %s534 = sadd.s32 %s533, 0
        %s535 = scalar_lea.vmem %s309, %s534 [#allocation3]
        %v536 = vld [vmem:[%s535] sm:$0xff]
        %v537 = vld [vmem:[%s535 + $0x8] sm:$0xff]
        %v539 = vsel %vm406, %v536, 0
        %v542 = vsel %vm406, %v537, 0
        %544 = vmatpush.msra.mxu0 0.0
        %545 = vmatpush.msra.mxu0 0.0
        %546 = vmatpush.msra.mxu0 0.0
        %547 = vmatpush.msra.mxu0 0.0
        %548 = vmatpush.msra.mxu0 0.0
        %549 = vmatpush.msra.mxu0 0.0
        %550 = vmatpush.msra.mxu0 0.0
        %551 = vmatpush.msra.mxu0 0.0
        %552 = vmatpush.msra.mxu0 %v376
        %553 = vmatpush.msra.mxu0 %v375
        %554 = vmatpush.msra.mxu0 %v374
        %555 = vmatpush.msra.mxu0 %v373
        %556 = vmatpush.msra.mxu0 %v372
        %557 = vmatpush.msra.mxu0 %v371
        %558 = vmatpush.msra.mxu0 %v370
        %559 = vmatpush.msra.mxu0 %v369
        %560 = vmatmul.f32.gmra.mxu0 %v539
        %v561 = vpop.f32.mrf.mxu0
        %v562 = vadd.f32 0.0, %v561
        %563 = vmatmul.f32.gmra.mxu0 %v542
        %v564 = vpop.f32.mrf.mxu0
        %v565 = vadd.f32 0.0, %v564
        %566 = vdwg.mxu0
        %569 = vrot.lane.b32.xlu0 %v562, 120
        %v570 = vpop.permute.xlu0 %569
        %571 = vrot.lane.b32.xlu0 %v565, 120
        %v572 = vpop.permute.xlu0 %571
        %573 = vrot.lane.b32.xlu0 %v562, 112
        %v574 = vpop.permute.xlu0 %573
        %575 = vrot.lane.b32.xlu0 %v565, 112
        %v576 = vpop.permute.xlu0 %575
        %577 = vrot.lane.b32.xlu0 %v562, 104
        %v578 = vpop.permute.xlu0 %577
        %579 = vrot.lane.b32.xlu0 %v565, 104
        %v580 = vpop.permute.xlu0 %579
        %581 = vrot.lane.b32.xlu0 %v562, 96
        %v582 = vpop.permute.xlu0 %581
        %583 = vrot.lane.b32.xlu0 %v565, 96
        %v584 = vpop.permute.xlu0 %583
        %585 = vrot.lane.b32.xlu0 %v562, 88
        %v586 = vpop.permute.xlu0 %585
        %587 = vrot.lane.b32.xlu0 %v565, 88
        %v588 = vpop.permute.xlu0 %587
        %589 = vrot.lane.b32.xlu0 %v562, 80
        %v590 = vpop.permute.xlu0 %589
        %591 = vrot.lane.b32.xlu0 %v565, 80
        %v592 = vpop.permute.xlu0 %591
        %593 = vrot.lane.b32.xlu0 %v562, 72
        %v594 = vpop.permute.xlu0 %593
        %595 = vrot.lane.b32.xlu0 %v565, 72
        %v596 = vpop.permute.xlu0 %595
        %vm597 = vcmask 64512
        %v598 = vsel %vm597, %v562, 0
        %v600 = vsel %vm597, %v565, 0
        %v602 = vsel %vm597, %v431, 0
        %v604 = vsel %vm597, %v434, 0
        %606 = vmatpush.xpose.msra.mxu0 0.0
        %607 = vmatpush.xpose.msra.mxu0 0.0
        %608 = vmatpush.xpose.msra.mxu0 0.0
        %609 = vmatpush.xpose.msra.mxu0 0.0
        %610 = vmatpush.xpose.msra.mxu0 0.0
        %611 = vmatpush.xpose.msra.mxu0 0.0
        %612 = vmatpush.xpose.msra.mxu0 0.0
        %613 = vmatpush.xpose.msra.mxu0 0.0
        %614 = vmatpush.xpose.msra.mxu0 0.0
        %615 = vmatpush.xpose.msra.mxu0 0.0
        %616 = vmatpush.xpose.msra.mxu0 0.0
        %617 = vmatpush.xpose.msra.mxu0 0.0
        %618 = vmatpush.xpose.msra.mxu0 0.0
        %619 = vmatpush.xpose.msra.mxu0 0.0
        %620 = vmatpush.xpose.msra.mxu0 %v604
        %621 = vmatpush.xpose.msra.mxu0 %v602
        %622 = vmatmul.f32.gmra.mxu0 %v598
        %v623 = vpop.f32.mrf.mxu0
        %v624 = vadd.f32 0.0, %v623
        %625 = vmatmul.f32.gmra.mxu0 %v600
        %v626 = vpop.f32.mrf.mxu0
        %v627 = vadd.f32 0.0, %v626
        %628 = vdwg.mxu0
        %v629 = vsel %vm597, %v570, 0
        %v631 = vsel %vm597, %v572, 0
        %v633 = vsel %vm597, %v462, 0
        %v635 = vsel %vm597, %v464, 0
        %637 = vmatpush.xpose.msra.mxu0 0.0
        %638 = vmatpush.xpose.msra.mxu0 0.0
        %639 = vmatpush.xpose.msra.mxu0 0.0
        %640 = vmatpush.xpose.msra.mxu0 0.0
        %641 = vmatpush.xpose.msra.mxu0 0.0
        %642 = vmatpush.xpose.msra.mxu0 0.0
        %643 = vmatpush.xpose.msra.mxu0 0.0
        %644 = vmatpush.xpose.msra.mxu0 0.0
        %645 = vmatpush.xpose.msra.mxu0 0.0
        %646 = vmatpush.xpose.msra.mxu0 0.0
        %647 = vmatpush.xpose.msra.mxu0 0.0
        %648 = vmatpush.xpose.msra.mxu0 0.0
        %649 = vmatpush.xpose.msra.mxu0 0.0
        %650 = vmatpush.xpose.msra.mxu0 0.0
        %651 = vmatpush.xpose.msra.mxu0 %v635
        %652 = vmatpush.xpose.msra.mxu0 %v633
        %653 = vmatmul.f32.gmra.mxu0 %v629
        %v654 = vpop.f32.mrf.mxu0
        %v655 = vadd.f32 0.0, %v654
        %656 = vmatmul.f32.gmra.mxu0 %v631
        %v657 = vpop.f32.mrf.mxu0
        %v658 = vadd.f32 0.0, %v657
        %659 = vdwg.mxu0
        %v660 = vsel %vm597, %v574, 0
        %v662 = vsel %vm597, %v576, 0
        %v664 = vsel %vm597, %v466, 0
        %v666 = vsel %vm597, %v468, 0
        %668 = vmatpush.xpose.msra.mxu0 0.0
        %669 = vmatpush.xpose.msra.mxu0 0.0
        %670 = vmatpush.xpose.msra.mxu0 0.0
        %671 = vmatpush.xpose.msra.mxu0 0.0
        %672 = vmatpush.xpose.msra.mxu0 0.0
        %673 = vmatpush.xpose.msra.mxu0 0.0
        %674 = vmatpush.xpose.msra.mxu0 0.0
        %675 = vmatpush.xpose.msra.mxu0 0.0
        %676 = vmatpush.xpose.msra.mxu0 0.0
        %677 = vmatpush.xpose.msra.mxu0 0.0
        %678 = vmatpush.xpose.msra.mxu0 0.0
        %679 = vmatpush.xpose.msra.mxu0 0.0
        %680 = vmatpush.xpose.msra.mxu0 0.0
        %681 = vmatpush.xpose.msra.mxu0 0.0
        %682 = vmatpush.xpose.msra.mxu0 %v666
        %683 = vmatpush.xpose.msra.mxu0 %v664
        %684 = vmatmul.f32.gmra.mxu0 %v660
        %v685 = vpop.f32.mrf.mxu0
        %v686 = vadd.f32 0.0, %v685
        %687 = vmatmul.f32.gmra.mxu0 %v662
        %v688 = vpop.f32.mrf.mxu0
        %v689 = vadd.f32 0.0, %v688
        %690 = vdwg.mxu0
        %v691 = vsel %vm597, %v578, 0
        %v693 = vsel %vm597, %v580, 0
        %v695 = vsel %vm597, %v470, 0
        %v697 = vsel %vm597, %v472, 0
        %699 = vmatpush.xpose.msra.mxu0 0.0
        %700 = vmatpush.xpose.msra.mxu0 0.0
        %701 = vmatpush.xpose.msra.mxu0 0.0
        %702 = vmatpush.xpose.msra.mxu0 0.0
        %703 = vmatpush.xpose.msra.mxu0 0.0
        %704 = vmatpush.xpose.msra.mxu0 0.0
        %705 = vmatpush.xpose.msra.mxu0 0.0
        %706 = vmatpush.xpose.msra.mxu0 0.0
        %707 = vmatpush.xpose.msra.mxu0 0.0
        %708 = vmatpush.xpose.msra.mxu0 0.0
        %709 = vmatpush.xpose.msra.mxu0 0.0
        %710 = vmatpush.xpose.msra.mxu0 0.0
        %711 = vmatpush.xpose.msra.mxu0 0.0
        %712 = vmatpush.xpose.msra.mxu0 0.0
        %713 = vmatpush.xpose.msra.mxu0 %v697
        %714 = vmatpush.xpose.msra.mxu0 %v695
        %715 = vmatmul.f32.gmra.mxu0 %v691
        %v716 = vpop.f32.mrf.mxu0
        %v717 = vadd.f32 0.0, %v716
        %718 = vmatmul.f32.gmra.mxu0 %v693
        %v719 = vpop.f32.mrf.mxu0
        %v720 = vadd.f32 0.0, %v719
        %721 = vdwg.mxu0
        %v722 = vsel %vm597, %v582, 0
        %v724 = vsel %vm597, %v584, 0
        %v726 = vsel %vm597, %v474, 0
        %v728 = vsel %vm597, %v476, 0
        %730 = vmatpush.xpose.msra.mxu0 0.0
        %731 = vmatpush.xpose.msra.mxu0 0.0
        %732 = vmatpush.xpose.msra.mxu0 0.0
        %733 = vmatpush.xpose.msra.mxu0 0.0
        %734 = vmatpush.xpose.msra.mxu0 0.0
        %735 = vmatpush.xpose.msra.mxu0 0.0
        %736 = vmatpush.xpose.msra.mxu0 0.0
        %737 = vmatpush.xpose.msra.mxu0 0.0
        %738 = vmatpush.xpose.msra.mxu0 0.0
        %739 = vmatpush.xpose.msra.mxu0 0.0
        %740 = vmatpush.xpose.msra.mxu0 0.0
        %741 = vmatpush.xpose.msra.mxu0 0.0
        %742 = vmatpush.xpose.msra.mxu0 0.0
        %743 = vmatpush.xpose.msra.mxu0 0.0
        %744 = vmatpush.xpose.msra.mxu0 %v728
        %745 = vmatpush.xpose.msra.mxu0 %v726
        %746 = vmatmul.f32.gmra.mxu0 %v722
        %v747 = vpop.f32.mrf.mxu0
        %v748 = vadd.f32 0.0, %v747
        %749 = vmatmul.f32.gmra.mxu0 %v724
        %v750 = vpop.f32.mrf.mxu0
        %v751 = vadd.f32 0.0, %v750
        %752 = vdwg.mxu0
        %v753 = vsel %vm597, %v586, 0
        %v755 = vsel %vm597, %v588, 0
        %v757 = vsel %vm597, %v478, 0
        %v759 = vsel %vm597, %v480, 0
        %761 = vmatpush.xpose.msra.mxu0 0.0
        %762 = vmatpush.xpose.msra.mxu0 0.0
        %763 = vmatpush.xpose.msra.mxu0 0.0
        %764 = vmatpush.xpose.msra.mxu0 0.0
        %765 = vmatpush.xpose.msra.mxu0 0.0
        %766 = vmatpush.xpose.msra.mxu0 0.0
        %767 = vmatpush.xpose.msra.mxu0 0.0
        %768 = vmatpush.xpose.msra.mxu0 0.0
        %769 = vmatpush.xpose.msra.mxu0 0.0
        %770 = vmatpush.xpose.msra.mxu0 0.0
        %771 = vmatpush.xpose.msra.mxu0 0.0
        %772 = vmatpush.xpose.msra.mxu0 0.0
        %773 = vmatpush.xpose.msra.mxu0 0.0
        %774 = vmatpush.xpose.msra.mxu0 0.0
        %775 = vmatpush.xpose.msra.mxu0 %v759
        %776 = vmatpush.xpose.msra.mxu0 %v757
        %777 = vmatmul.f32.gmra.mxu0 %v753
        %v778 = vpop.f32.mrf.mxu0
        %v779 = vadd.f32 0.0, %v778
        %780 = vmatmul.f32.gmra.mxu0 %v755
        %v781 = vpop.f32.mrf.mxu0
        %v782 = vadd.f32 0.0, %v781
        %783 = vdwg.mxu0
        %v784 = vsel %vm597, %v590, 0
        %v786 = vsel %vm597, %v592, 0
        %v788 = vsel %vm597, %v482, 0
        %v790 = vsel %vm597, %v484, 0
        %792 = vmatpush.xpose.msra.mxu0 0.0
        %793 = vmatpush.xpose.msra.mxu0 0.0
        %794 = vmatpush.xpose.msra.mxu0 0.0
        %795 = vmatpush.xpose.msra.mxu0 0.0
        %796 = vmatpush.xpose.msra.mxu0 0.0
        %797 = vmatpush.xpose.msra.mxu0 0.0
        %798 = vmatpush.xpose.msra.mxu0 0.0
        %799 = vmatpush.xpose.msra.mxu0 0.0
        %800 = vmatpush.xpose.msra.mxu0 0.0
        %801 = vmatpush.xpose.msra.mxu0 0.0
        %802 = vmatpush.xpose.msra.mxu0 0.0
        %803 = vmatpush.xpose.msra.mxu0 0.0
        %804 = vmatpush.xpose.msra.mxu0 0.0
        %805 = vmatpush.xpose.msra.mxu0 0.0
        %806 = vmatpush.xpose.msra.mxu0 %v790
        %807 = vmatpush.xpose.msra.mxu0 %v788
        %808 = vmatmul.f32.gmra.mxu0 %v784
        %v809 = vpop.f32.mrf.mxu0
        %v810 = vadd.f32 0.0, %v809
        %811 = vmatmul.f32.gmra.mxu0 %v786
        %v812 = vpop.f32.mrf.mxu0
        %v813 = vadd.f32 0.0, %v812
        %814 = vdwg.mxu0
        %v815 = vsel %vm597, %v594, 0
        %v817 = vsel %vm597, %v596, 0
        %v819 = vsel %vm597, %v486, 0
        %v821 = vsel %vm597, %v488, 0
        %823 = vmatpush.xpose.msra.mxu0 0.0
        %824 = vmatpush.xpose.msra.mxu0 0.0
        %825 = vmatpush.xpose.msra.mxu0 0.0
        %826 = vmatpush.xpose.msra.mxu0 0.0
        %827 = vmatpush.xpose.msra.mxu0 0.0
        %828 = vmatpush.xpose.msra.mxu0 0.0
        %829 = vmatpush.xpose.msra.mxu0 0.0
        %830 = vmatpush.xpose.msra.mxu0 0.0
        %831 = vmatpush.xpose.msra.mxu0 0.0
        %832 = vmatpush.xpose.msra.mxu0 0.0
        %833 = vmatpush.xpose.msra.mxu0 0.0
        %834 = vmatpush.xpose.msra.mxu0 0.0
        %835 = vmatpush.xpose.msra.mxu0 0.0
        %836 = vmatpush.xpose.msra.mxu0 0.0
        %837 = vmatpush.xpose.msra.mxu0 %v821
        %838 = vmatpush.xpose.msra.mxu0 %v819
        %839 = vmatmul.f32.gmra.mxu0 %v815
        %v840 = vpop.f32.mrf.mxu0
        %v841 = vadd.f32 0.0, %v840
        %842 = vmatmul.f32.gmra.mxu0 %v817
        %v843 = vpop.f32.mrf.mxu0
        %v844 = vadd.f32 0.0, %v843
        %845 = vdwg.mxu0
        %vm846 = vcmask 130048
        %v847 = vsel %vm846, %v624, -inf
        %848 = vmax.xlane.f32.xlu0 %v847
        %v849 = vpop.xlane.xlu0 %848
        %v850 = vsel %vm846, %v627, -inf
        %851 = vmax.xlane.f32.xlu0 %v850
        %v852 = vpop.xlane.xlu0 %851
        %v853 = vsel %vm846, %v655, -inf
        %854 = vmax.xlane.f32.xlu0 %v853
        %v855 = vpop.xlane.xlu0 %854
        %v856 = vsel %vm846, %v658, -inf
        %857 = vmax.xlane.f32.xlu0 %v856
        %v858 = vpop.xlane.xlu0 %857
        %v859 = vsel %vm846, %v686, -inf
        %860 = vmax.xlane.f32.xlu0 %v859
        %v861 = vpop.xlane.xlu0 %860
        %v862 = vsel %vm846, %v689, -inf
        %863 = vmax.xlane.f32.xlu0 %v862
        %v864 = vpop.xlane.xlu0 %863
        %v865 = vsel %vm846, %v717, -inf
        %866 = vmax.xlane.f32.xlu0 %v865
        %v867 = vpop.xlane.xlu0 %866
        %v868 = vsel %vm846, %v720, -inf
        %869 = vmax.xlane.f32.xlu0 %v868
        %v870 = vpop.xlane.xlu0 %869
        %v871 = vsel %vm846, %v748, -inf
        %872 = vmax.xlane.f32.xlu0 %v871
        %v873 = vpop.xlane.xlu0 %872
        %v874 = vsel %vm846, %v751, -inf
        %875 = vmax.xlane.f32.xlu0 %v874
        %v876 = vpop.xlane.xlu0 %875
        %v877 = vsel %vm846, %v779, -inf
        %878 = vmax.xlane.f32.xlu0 %v877
        %v879 = vpop.xlane.xlu0 %878
        %v880 = vsel %vm846, %v782, -inf
        %881 = vmax.xlane.f32.xlu0 %v880
        %v882 = vpop.xlane.xlu0 %881
        %v883 = vsel %vm846, %v810, -inf
        %884 = vmax.xlane.f32.xlu0 %v883
        %v885 = vpop.xlane.xlu0 %884
        %v886 = vsel %vm846, %v813, -inf
        %887 = vmax.xlane.f32.xlu0 %v886
        %v888 = vpop.xlane.xlu0 %887
        %v889 = vsel %vm846, %v841, -inf
        %890 = vmax.xlane.f32.xlu0 %v889
        %v891 = vpop.xlane.xlu0 %890
        %v892 = vsel %vm846, %v844, -inf
        %893 = vmax.xlane.f32.xlu0 %v892
        %v894 = vpop.xlane.xlu0 %893
        %v895 = vsub.f32 %v624, %v849
        %v896 = vsub.f32 %v627, %v852
        %v897 = vsub.f32 %v655, %v855
        %v898 = vsub.f32 %v658, %v858
        %v899 = vsub.f32 %v686, %v861
        %v900 = vsub.f32 %v689, %v864
        %v901 = vsub.f32 %v717, %v867
        %v902 = vsub.f32 %v720, %v870
        %v903 = vsub.f32 %v748, %v873
        %v904 = vsub.f32 %v751, %v876
        %v905 = vsub.f32 %v779, %v879
        %v906 = vsub.f32 %v782, %v882
        %v907 = vsub.f32 %v810, %v885
        %v908 = vsub.f32 %v813, %v888
        %v909 = vsub.f32 %v841, %v891
        %v910 = vsub.f32 %v844, %v894
        %v911 = vmul.f32 %v895, 1.442695
        %v912 = vpow.pop %v911
        %v913 = vmul.f32 %v896, 1.442695
        %v914 = vpow.pop %v913
        %v915 = vmul.f32 %v897, 1.442695
        %v916 = vpow.pop %v915
        %v917 = vmul.f32 %v898, 1.442695
        %v918 = vpow.pop %v917
        %v919 = vmul.f32 %v899, 1.442695
        %v920 = vpow.pop %v919
        %v921 = vmul.f32 %v900, 1.442695
        %v922 = vpow.pop %v921
        %v923 = vmul.f32 %v901, 1.442695
        %v924 = vpow.pop %v923
        %v925 = vmul.f32 %v902, 1.442695
        %v926 = vpow.pop %v925
        %v927 = vmul.f32 %v903, 1.442695
        %v928 = vpow.pop %v927
        %v929 = vmul.f32 %v904, 1.442695
        %v930 = vpow.pop %v929
        %v931 = vmul.f32 %v905, 1.442695
        %v932 = vpow.pop %v931
        %v933 = vmul.f32 %v906, 1.442695
        %v934 = vpow.pop %v933
        %v935 = vmul.f32 %v907, 1.442695
        %v936 = vpow.pop %v935
        %v937 = vmul.f32 %v908, 1.442695
        %v938 = vpow.pop %v937
        %v939 = vmul.f32 %v909, 1.442695
        %v940 = vpow.pop %v939
        %v941 = vmul.f32 %v910, 1.442695
        %v942 = vpow.pop %v941
        %v943 = vsel %vm846, %v912, 0.0
        %944 = vadd.xlane.f32.xlu0 %v943
        %v945 = vpop.xlane.xlu0 %944
        %v946 = vsel %vm846, %v914, 0.0
        %947 = vadd.xlane.f32.xlu0 %v946
        %v948 = vpop.xlane.xlu0 %947
        %v949 = vsel %vm846, %v916, 0.0
        %950 = vadd.xlane.f32.xlu0 %v949
        %v951 = vpop.xlane.xlu0 %950
        %v952 = vsel %vm846, %v918, 0.0
        %953 = vadd.xlane.f32.xlu0 %v952
        %v954 = vpop.xlane.xlu0 %953
        %v955 = vsel %vm846, %v920, 0.0
        %956 = vadd.xlane.f32.xlu0 %v955
        %v957 = vpop.xlane.xlu0 %956
        %v958 = vsel %vm846, %v922, 0.0
        %959 = vadd.xlane.f32.xlu0 %v958
        %v960 = vpop.xlane.xlu0 %959
        %v961 = vsel %vm846, %v924, 0.0
        %962 = vadd.xlane.f32.xlu0 %v961
        %v963 = vpop.xlane.xlu0 %962
        %v964 = vsel %vm846, %v926, 0.0
        %965 = vadd.xlane.f32.xlu0 %v964
        %v966 = vpop.xlane.xlu0 %965
        %v967 = vsel %vm846, %v928, 0.0
        %968 = vadd.xlane.f32.xlu0 %v967
        %v969 = vpop.xlane.xlu0 %968
        %v970 = vsel %vm846, %v930, 0.0
        %971 = vadd.xlane.f32.xlu0 %v970
        %v972 = vpop.xlane.xlu0 %971
        %v973 = vsel %vm846, %v932, 0.0
        %974 = vadd.xlane.f32.xlu0 %v973
        %v975 = vpop.xlane.xlu0 %974
        %v976 = vsel %vm846, %v934, 0.0
        %977 = vadd.xlane.f32.xlu0 %v976
        %v978 = vpop.xlane.xlu0 %977
        %v979 = vsel %vm846, %v936, 0.0
        %980 = vadd.xlane.f32.xlu0 %v979
        %v981 = vpop.xlane.xlu0 %980
        %v982 = vsel %vm846, %v938, 0.0
        %983 = vadd.xlane.f32.xlu0 %v982
        %v984 = vpop.xlane.xlu0 %983
        %v985 = vsel %vm846, %v940, 0.0
        %986 = vadd.xlane.f32.xlu0 %v985
        %v987 = vpop.xlane.xlu0 %986
        %v988 = vsel %vm846, %v942, 0.0
        %989 = vadd.xlane.f32.xlu0 %v988
        %v990 = vpop.xlane.xlu0 %989
        %v992 = vsel %vm846, %v912, 0
        %v995 = vsel %vm846, %v914, 0
        %997 = vmatpush.msra.mxu0 0.0
        %998 = vmatpush.msra.mxu0 0.0
        %999 = vmatpush.msra.mxu0 0.0
        %1000 = vmatpush.msra.mxu0 0.0
        %1001 = vmatpush.msra.mxu0 0.0
        %1002 = vmatpush.msra.mxu0 0.0
        %1003 = vmatpush.msra.mxu0 0.0
        %1004 = vmatpush.msra.mxu0 0.0
        %1005 = vmatpush.msra.mxu0 0.0
        %1006 = vmatpush.msra.mxu0 0.0
        %1007 = vmatpush.msra.mxu0 0.0
        %1008 = vmatpush.msra.mxu0 0.0
        %1009 = vmatpush.msra.mxu0 0.0
        %1010 = vmatpush.msra.mxu0 0.0
        %1011 = vmatpush.msra.mxu0 %v457
        %1012 = vmatpush.msra.mxu0 %v454
        %1013 = vmatmul.f32.gmra.mxu0 %v992
        %v1014 = vpop.f32.mrf.mxu0
        %v1015 = vadd.f32 0.0, %v1014
        %1016 = vmatmul.f32.gmra.mxu0 %v995
        %v1017 = vpop.f32.mrf.mxu0
        %v1018 = vadd.f32 0.0, %v1017
        %1019 = vdwg.mxu0
        %v1021 = vsel %vm846, %v916, 0
        %v1024 = vsel %vm846, %v918, 0
        %1026 = vmatpush.msra.mxu0 0.0
        %1027 = vmatpush.msra.mxu0 0.0
        %1028 = vmatpush.msra.mxu0 0.0
        %1029 = vmatpush.msra.mxu0 0.0
        %1030 = vmatpush.msra.mxu0 0.0
        %1031 = vmatpush.msra.mxu0 0.0
        %1032 = vmatpush.msra.mxu0 0.0
        %1033 = vmatpush.msra.mxu0 0.0
        %1034 = vmatpush.msra.mxu0 0.0
        %1035 = vmatpush.msra.mxu0 0.0
        %1036 = vmatpush.msra.mxu0 0.0
        %1037 = vmatpush.msra.mxu0 0.0
        %1038 = vmatpush.msra.mxu0 0.0
        %1039 = vmatpush.msra.mxu0 0.0
        %1040 = vmatpush.msra.mxu0 %v494
        %1041 = vmatpush.msra.mxu0 %v492
        %1042 = vmatmul.f32.gmra.mxu0 %v1021
        %v1043 = vpop.f32.mrf.mxu0
        %v1044 = vadd.f32 0.0, %v1043
        %1045 = vmatmul.f32.gmra.mxu0 %v1024
        %v1046 = vpop.f32.mrf.mxu0
        %v1047 = vadd.f32 0.0, %v1046
        %1048 = vdwg.mxu0
        %v1050 = vsel %vm846, %v920, 0
        %v1053 = vsel %vm846, %v922, 0
        %1055 = vmatpush.msra.mxu0 0.0
        %1056 = vmatpush.msra.mxu0 0.0
        %1057 = vmatpush.msra.mxu0 0.0
        %1058 = vmatpush.msra.mxu0 0.0
        %1059 = vmatpush.msra.mxu0 0.0
        %1060 = vmatpush.msra.mxu0 0.0
        %1061 = vmatpush.msra.mxu0 0.0
        %1062 = vmatpush.msra.mxu0 0.0
        %1063 = vmatpush.msra.mxu0 0.0
        %1064 = vmatpush.msra.mxu0 0.0
        %1065 = vmatpush.msra.mxu0 0.0
        %1066 = vmatpush.msra.mxu0 0.0
        %1067 = vmatpush.msra.mxu0 0.0
        %1068 = vmatpush.msra.mxu0 0.0
        %1069 = vmatpush.msra.mxu0 %v500
        %1070 = vmatpush.msra.mxu0 %v498
        %1071 = vmatmul.f32.gmra.mxu0 %v1050
        %v1072 = vpop.f32.mrf.mxu0
        %v1073 = vadd.f32 0.0, %v1072
        %1074 = vmatmul.f32.gmra.mxu0 %v1053
        %v1075 = vpop.f32.mrf.mxu0
        %v1076 = vadd.f32 0.0, %v1075
        %1077 = vdwg.mxu0
        %v1079 = vsel %vm846, %v924, 0
        %v1082 = vsel %vm846, %v926, 0
        %1084 = vmatpush.msra.mxu0 0.0
        %1085 = vmatpush.msra.mxu0 0.0
        %1086 = vmatpush.msra.mxu0 0.0
        %1087 = vmatpush.msra.mxu0 0.0
        %1088 = vmatpush.msra.mxu0 0.0
        %1089 = vmatpush.msra.mxu0 0.0
        %1090 = vmatpush.msra.mxu0 0.0
        %1091 = vmatpush.msra.mxu0 0.0
        %1092 = vmatpush.msra.mxu0 0.0
        %1093 = vmatpush.msra.mxu0 0.0
        %1094 = vmatpush.msra.mxu0 0.0
        %1095 = vmatpush.msra.mxu0 0.0
        %1096 = vmatpush.msra.mxu0 0.0
        %1097 = vmatpush.msra.mxu0 0.0
        %1098 = vmatpush.msra.mxu0 %v506
        %1099 = vmatpush.msra.mxu0 %v504
        %1100 = vmatmul.f32.gmra.mxu0 %v1079
        %v1101 = vpop.f32.mrf.mxu0
        %v1102 = vadd.f32 0.0, %v1101
        %1103 = vmatmul.f32.gmra.mxu0 %v1082
        %v1104 = vpop.f32.mrf.mxu0
        %v1105 = vadd.f32 0.0, %v1104
        %1106 = vdwg.mxu0
        %v1108 = vsel %vm846, %v928, 0
        %v1111 = vsel %vm846, %v930, 0
        %1113 = vmatpush.msra.mxu0 0.0
        %1114 = vmatpush.msra.mxu0 0.0
        %1115 = vmatpush.msra.mxu0 0.0
        %1116 = vmatpush.msra.mxu0 0.0
        %1117 = vmatpush.msra.mxu0 0.0
        %1118 = vmatpush.msra.mxu0 0.0
        %1119 = vmatpush.msra.mxu0 0.0
        %1120 = vmatpush.msra.mxu0 0.0
        %1121 = vmatpush.msra.mxu0 0.0
        %1122 = vmatpush.msra.mxu0 0.0
        %1123 = vmatpush.msra.mxu0 0.0
        %1124 = vmatpush.msra.mxu0 0.0
        %1125 = vmatpush.msra.mxu0 0.0
        %1126 = vmatpush.msra.mxu0 0.0
        %1127 = vmatpush.msra.mxu0 %v512
        %1128 = vmatpush.msra.mxu0 %v510
        %1129 = vmatmul.f32.gmra.mxu0 %v1108
        %v1130 = vpop.f32.mrf.mxu0
        %v1131 = vadd.f32 0.0, %v1130
        %1132 = vmatmul.f32.gmra.mxu0 %v1111
        %v1133 = vpop.f32.mrf.mxu0
        %v1134 = vadd.f32 0.0, %v1133
        %1135 = vdwg.mxu0
        %v1137 = vsel %vm846, %v932, 0
        %v1140 = vsel %vm846, %v934, 0
        %1142 = vmatpush.msra.mxu0 0.0
        %1143 = vmatpush.msra.mxu0 0.0
        %1144 = vmatpush.msra.mxu0 0.0
        %1145 = vmatpush.msra.mxu0 0.0
        %1146 = vmatpush.msra.mxu0 0.0
        %1147 = vmatpush.msra.mxu0 0.0
        %1148 = vmatpush.msra.mxu0 0.0
        %1149 = vmatpush.msra.mxu0 0.0
        %1150 = vmatpush.msra.mxu0 0.0
        %1151 = vmatpush.msra.mxu0 0.0
        %1152 = vmatpush.msra.mxu0 0.0
        %1153 = vmatpush.msra.mxu0 0.0
        %1154 = vmatpush.msra.mxu0 0.0
        %1155 = vmatpush.msra.mxu0 0.0
        %1156 = vmatpush.msra.mxu0 %v518
        %1157 = vmatpush.msra.mxu0 %v516
        %1158 = vmatmul.f32.gmra.mxu0 %v1137
        %v1159 = vpop.f32.mrf.mxu0
        %v1160 = vadd.f32 0.0, %v1159
        %1161 = vmatmul.f32.gmra.mxu0 %v1140
        %v1162 = vpop.f32.mrf.mxu0
        %v1163 = vadd.f32 0.0, %v1162
        %1164 = vdwg.mxu0
        %v1166 = vsel %vm846, %v936, 0
        %v1169 = vsel %vm846, %v938, 0
        %1171 = vmatpush.msra.mxu0 0.0
        %1172 = vmatpush.msra.mxu0 0.0
        %1173 = vmatpush.msra.mxu0 0.0
        %1174 = vmatpush.msra.mxu0 0.0
        %1175 = vmatpush.msra.mxu0 0.0
        %1176 = vmatpush.msra.mxu0 0.0
        %1177 = vmatpush.msra.mxu0 0.0
        %1178 = vmatpush.msra.mxu0 0.0
        %1179 = vmatpush.msra.mxu0 0.0
        %1180 = vmatpush.msra.mxu0 0.0
        %1181 = vmatpush.msra.mxu0 0.0
        %1182 = vmatpush.msra.mxu0 0.0
        %1183 = vmatpush.msra.mxu0 0.0
        %1184 = vmatpush.msra.mxu0 0.0
        %1185 = vmatpush.msra.mxu0 %v524
        %1186 = vmatpush.msra.mxu0 %v522
        %1187 = vmatmul.f32.gmra.mxu0 %v1166
        %v1188 = vpop.f32.mrf.mxu0
        %v1189 = vadd.f32 0.0, %v1188
        %1190 = vmatmul.f32.gmra.mxu0 %v1169
        %v1191 = vpop.f32.mrf.mxu0
        %v1192 = vadd.f32 0.0, %v1191
        %1193 = vdwg.mxu0
        %v1195 = vsel %vm846, %v940, 0
        %v1198 = vsel %vm846, %v942, 0
        %1200 = vmatpush.msra.mxu0 0.0
        %1201 = vmatpush.msra.mxu0 0.0
        %1202 = vmatpush.msra.mxu0 0.0
        %1203 = vmatpush.msra.mxu0 0.0
        %1204 = vmatpush.msra.mxu0 0.0
        %1205 = vmatpush.msra.mxu0 0.0
        %1206 = vmatpush.msra.mxu0 0.0
        %1207 = vmatpush.msra.mxu0 0.0
        %1208 = vmatpush.msra.mxu0 0.0
        %1209 = vmatpush.msra.mxu0 0.0
        %1210 = vmatpush.msra.mxu0 0.0
        %1211 = vmatpush.msra.mxu0 0.0
        %1212 = vmatpush.msra.mxu0 0.0
        %1213 = vmatpush.msra.mxu0 0.0
        %1214 = vmatpush.msra.mxu0 %v530
        %1215 = vmatpush.msra.mxu0 %v528
        %1216 = vmatmul.f32.gmra.mxu0 %v1195
        %v1217 = vpop.f32.mrf.mxu0
        %v1218 = vadd.f32 0.0, %v1217
        %1219 = vmatmul.f32.gmra.mxu0 %v1198
        %v1220 = vpop.f32.mrf.mxu0
        %v1221 = vadd.f32 0.0, %v1220
        %1222 = vdwg.mxu0
        %v1223 = vrcp.pop %v945
        %v1224 = vmul.f32 %v945, %v1223
        %v1225 = vsub.f32 1.0, %v1224
        %v1226 = vmul.f32 %v1223, %v1225
        %v1227 = vadd.f32 %v1223, %v1226
        %vm1228 = vweird.f32 %v945
        %vm1229 = vweird.f32 %v1223
        %vm1230 = vmor %vm1228, %vm1229
        %v1231 = vsel %vm1230, %v1223, %v1227
        %v1232 = vand.u32 2147483647, %v945
        %vm1233 = vcmp.eq.f32.partialorder %v1232, 8.507059e+37
        %v1234 = vand.u32 %v945, 2147483648
        %v1235 = vor.u32 1.1754944e-38, %v1234
        %v1236 = vsel %vm1233, %v1235, %v1231
        %v1237 = vrcp.pop %v948
        %v1238 = vmul.f32 %v948, %v1237
        %v1239 = vsub.f32 1.0, %v1238
        %v1240 = vmul.f32 %v1237, %v1239
        %v1241 = vadd.f32 %v1237, %v1240
        %vm1242 = vweird.f32 %v948
        %vm1243 = vweird.f32 %v1237
        %vm1244 = vmor %vm1242, %vm1243
        %v1245 = vsel %vm1244, %v1237, %v1241
        %v1246 = vand.u32 2147483647, %v948
        %vm1247 = vcmp.eq.f32.partialorder %v1246, 8.507059e+37
        %v1248 = vand.u32 %v948, 2147483648
        %v1249 = vor.u32 1.1754944e-38, %v1248
        %v1250 = vsel %vm1247, %v1249, %v1245
        %v1251 = vrcp.pop %v951
        %v1252 = vmul.f32 %v951, %v1251
        %v1253 = vsub.f32 1.0, %v1252
        %v1254 = vmul.f32 %v1251, %v1253
        %v1255 = vadd.f32 %v1251, %v1254
        %vm1256 = vweird.f32 %v951
        %vm1257 = vweird.f32 %v1251
        %vm1258 = vmor %vm1256, %vm1257
        %v1259 = vsel %vm1258, %v1251, %v1255
        %v1260 = vand.u32 2147483647, %v951
        %vm1261 = vcmp.eq.f32.partialorder %v1260, 8.507059e+37
        %v1262 = vand.u32 %v951, 2147483648
        %v1263 = vor.u32 1.1754944e-38, %v1262
        %v1264 = vsel %vm1261, %v1263, %v1259
        %v1265 = vrcp.pop %v954
        %v1266 = vmul.f32 %v954, %v1265
        %v1267 = vsub.f32 1.0, %v1266
        %v1268 = vmul.f32 %v1265, %v1267
        %v1269 = vadd.f32 %v1265, %v1268
        %vm1270 = vweird.f32 %v954
        %vm1271 = vweird.f32 %v1265
        %vm1272 = vmor %vm1270, %vm1271
        %v1273 = vsel %vm1272, %v1265, %v1269
        %v1274 = vand.u32 2147483647, %v954
        %vm1275 = vcmp.eq.f32.partialorder %v1274, 8.507059e+37
        %v1276 = vand.u32 %v954, 2147483648
        %v1277 = vor.u32 1.1754944e-38, %v1276
        %v1278 = vsel %vm1275, %v1277, %v1273
        %v1279 = vrcp.pop %v957
        %v1280 = vmul.f32 %v957, %v1279
        %v1281 = vsub.f32 1.0, %v1280
        %v1282 = vmul.f32 %v1279, %v1281
        %v1283 = vadd.f32 %v1279, %v1282
        %vm1284 = vweird.f32 %v957
        %vm1285 = vweird.f32 %v1279
        %vm1286 = vmor %vm1284, %vm1285
        %v1287 = vsel %vm1286, %v1279, %v1283
        %v1288 = vand.u32 2147483647, %v957
        %vm1289 = vcmp.eq.f32.partialorder %v1288, 8.507059e+37
        %v1290 = vand.u32 %v957, 2147483648
        %v1291 = vor.u32 1.1754944e-38, %v1290
        %v1292 = vsel %vm1289, %v1291, %v1287
        %v1293 = vrcp.pop %v960
        %v1294 = vmul.f32 %v960, %v1293
        %v1295 = vsub.f32 1.0, %v1294
        %v1296 = vmul.f32 %v1293, %v1295
        %v1297 = vadd.f32 %v1293, %v1296
        %vm1298 = vweird.f32 %v960
        %vm1299 = vweird.f32 %v1293
        %vm1300 = vmor %vm1298, %vm1299
        %v1301 = vsel %vm1300, %v1293, %v1297
        %v1302 = vand.u32 2147483647, %v960
        %vm1303 = vcmp.eq.f32.partialorder %v1302, 8.507059e+37
        %v1304 = vand.u32 %v960, 2147483648
        %v1305 = vor.u32 1.1754944e-38, %v1304
        %v1306 = vsel %vm1303, %v1305, %v1301
        %v1307 = vrcp.pop %v963
        %v1308 = vmul.f32 %v963, %v1307
        %v1309 = vsub.f32 1.0, %v1308
        %v1310 = vmul.f32 %v1307, %v1309
        %v1311 = vadd.f32 %v1307, %v1310
        %vm1312 = vweird.f32 %v963
        %vm1313 = vweird.f32 %v1307
        %vm1314 = vmor %vm1312, %vm1313
        %v1315 = vsel %vm1314, %v1307, %v1311
        %v1316 = vand.u32 2147483647, %v963
        %vm1317 = vcmp.eq.f32.partialorder %v1316, 8.507059e+37
        %v1318 = vand.u32 %v963, 2147483648
        %v1319 = vor.u32 1.1754944e-38, %v1318
        %v1320 = vsel %vm1317, %v1319, %v1315
        %v1321 = vrcp.pop %v966
        %v1322 = vmul.f32 %v966, %v1321
        %v1323 = vsub.f32 1.0, %v1322
        %v1324 = vmul.f32 %v1321, %v1323
        %v1325 = vadd.f32 %v1321, %v1324
        %vm1326 = vweird.f32 %v966
        %vm1327 = vweird.f32 %v1321
        %vm1328 = vmor %vm1326, %vm1327
        %v1329 = vsel %vm1328, %v1321, %v1325
        %v1330 = vand.u32 2147483647, %v966
        %vm1331 = vcmp.eq.f32.partialorder %v1330, 8.507059e+37
        %v1332 = vand.u32 %v966, 2147483648
        %v1333 = vor.u32 1.1754944e-38, %v1332
        %v1334 = vsel %vm1331, %v1333, %v1329
        %v1335 = vrcp.pop %v969
        %v1336 = vmul.f32 %v969, %v1335
        %v1337 = vsub.f32 1.0, %v1336
        %v1338 = vmul.f32 %v1335, %v1337
        %v1339 = vadd.f32 %v1335, %v1338
        %vm1340 = vweird.f32 %v969
        %vm1341 = vweird.f32 %v1335
        %vm1342 = vmor %vm1340, %vm1341
        %v1343 = vsel %vm1342, %v1335, %v1339
        %v1344 = vand.u32 2147483647, %v969
        %vm1345 = vcmp.eq.f32.partialorder %v1344, 8.507059e+37
        %v1346 = vand.u32 %v969, 2147483648
        %v1347 = vor.u32 1.1754944e-38, %v1346
        %v1348 = vsel %vm1345, %v1347, %v1343
        %v1349 = vrcp.pop %v972
        %v1350 = vmul.f32 %v972, %v1349
        %v1351 = vsub.f32 1.0, %v1350
        %v1352 = vmul.f32 %v1349, %v1351
        %v1353 = vadd.f32 %v1349, %v1352
        %vm1354 = vweird.f32 %v972
        %vm1355 = vweird.f32 %v1349
        %vm1356 = vmor %vm1354, %vm1355
        %v1357 = vsel %vm1356, %v1349, %v1353
        %v1358 = vand.u32 2147483647, %v972
        %vm1359 = vcmp.eq.f32.partialorder %v1358, 8.507059e+37
        %v1360 = vand.u32 %v972, 2147483648
        %v1361 = vor.u32 1.1754944e-38, %v1360
        %v1362 = vsel %vm1359, %v1361, %v1357
        %v1363 = vrcp.pop %v975
        %v1364 = vmul.f32 %v975, %v1363
        %v1365 = vsub.f32 1.0, %v1364
        %v1366 = vmul.f32 %v1363, %v1365
        %v1367 = vadd.f32 %v1363, %v1366
        %vm1368 = vweird.f32 %v975
        %vm1369 = vweird.f32 %v1363
        %vm1370 = vmor %vm1368, %vm1369
        %v1371 = vsel %vm1370, %v1363, %v1367
        %v1372 = vand.u32 2147483647, %v975
        %vm1373 = vcmp.eq.f32.partialorder %v1372, 8.507059e+37
        %v1374 = vand.u32 %v975, 2147483648
        %v1375 = vor.u32 1.1754944e-38, %v1374
        %v1376 = vsel %vm1373, %v1375, %v1371
        %v1377 = vrcp.pop %v978
        %v1378 = vmul.f32 %v978, %v1377
        %v1379 = vsub.f32 1.0, %v1378
        %v1380 = vmul.f32 %v1377, %v1379
        %v1381 = vadd.f32 %v1377, %v1380
        %vm1382 = vweird.f32 %v978
        %vm1383 = vweird.f32 %v1377
        %vm1384 = vmor %vm1382, %vm1383
        %v1385 = vsel %vm1384, %v1377, %v1381
        %v1386 = vand.u32 2147483647, %v978
        %vm1387 = vcmp.eq.f32.partialorder %v1386, 8.507059e+37
        %v1388 = vand.u32 %v978, 2147483648
        %v1389 = vor.u32 1.1754944e-38, %v1388
        %v1390 = vsel %vm1387, %v1389, %v1385
        %v1391 = vrcp.pop %v981
        %v1392 = vmul.f32 %v981, %v1391
        %v1393 = vsub.f32 1.0, %v1392
        %v1394 = vmul.f32 %v1391, %v1393
        %v1395 = vadd.f32 %v1391, %v1394
        %vm1396 = vweird.f32 %v981
        %vm1397 = vweird.f32 %v1391
        %vm1398 = vmor %vm1396, %vm1397
        %v1399 = vsel %vm1398, %v1391, %v1395
        %v1400 = vand.u32 2147483647, %v981
        %vm1401 = vcmp.eq.f32.partialorder %v1400, 8.507059e+37
        %v1402 = vand.u32 %v981, 2147483648
        %v1403 = vor.u32 1.1754944e-38, %v1402
        %v1404 = vsel %vm1401, %v1403, %v1399
        %v1405 = vrcp.pop %v984
        %v1406 = vmul.f32 %v984, %v1405
        %v1407 = vsub.f32 1.0, %v1406
        %v1408 = vmul.f32 %v1405, %v1407
        %v1409 = vadd.f32 %v1405, %v1408
        %vm1410 = vweird.f32 %v984
        %vm1411 = vweird.f32 %v1405
        %vm1412 = vmor %vm1410, %vm1411
        %v1413 = vsel %vm1412, %v1405, %v1409
        %v1414 = vand.u32 2147483647, %v984
        %vm1415 = vcmp.eq.f32.partialorder %v1414, 8.507059e+37
        %v1416 = vand.u32 %v984, 2147483648
        %v1417 = vor.u32 1.1754944e-38, %v1416
        %v1418 = vsel %vm1415, %v1417, %v1413
        %v1419 = vrcp.pop %v987
        %v1420 = vmul.f32 %v987, %v1419
        %v1421 = vsub.f32 1.0, %v1420
        %v1422 = vmul.f32 %v1419, %v1421
        %v1423 = vadd.f32 %v1419, %v1422
        %vm1424 = vweird.f32 %v987
        %vm1425 = vweird.f32 %v1419
        %vm1426 = vmor %vm1424, %vm1425
        %v1427 = vsel %vm1426, %v1419, %v1423
        %v1428 = vand.u32 2147483647, %v987
        %vm1429 = vcmp.eq.f32.partialorder %v1428, 8.507059e+37
        %v1430 = vand.u32 %v987, 2147483648
        %v1431 = vor.u32 1.1754944e-38, %v1430
        %v1432 = vsel %vm1429, %v1431, %v1427
        %v1433 = vrcp.pop %v990
        %v1434 = vmul.f32 %v990, %v1433
        %v1435 = vsub.f32 1.0, %v1434
        %v1436 = vmul.f32 %v1433, %v1435
        %v1437 = vadd.f32 %v1433, %v1436
        %vm1438 = vweird.f32 %v990
        %vm1439 = vweird.f32 %v1433
        %vm1440 = vmor %vm1438, %vm1439
        %v1441 = vsel %vm1440, %v1433, %v1437
        %v1442 = vand.u32 2147483647, %v990
        %vm1443 = vcmp.eq.f32.partialorder %v1442, 8.507059e+37
        %v1444 = vand.u32 %v990, 2147483648
        %v1445 = vor.u32 1.1754944e-38, %v1444
        %v1446 = vsel %vm1443, %v1445, %v1441
        %v1447 = vmul.f32 %v1015, %v1236
        %v1448 = vmul.f32 %v1018, %v1250
        %v1449 = vmul.f32 %v1044, %v1264
        %v1450 = vmul.f32 %v1047, %v1278
        %v1451 = vmul.f32 %v1073, %v1292
        %v1452 = vmul.f32 %v1076, %v1306
        %v1453 = vmul.f32 %v1102, %v1320
        %v1454 = vmul.f32 %v1105, %v1334
        %v1455 = vmul.f32 %v1131, %v1348
        %v1456 = vmul.f32 %v1134, %v1362
        %v1457 = vmul.f32 %v1160, %v1376
        %v1458 = vmul.f32 %v1163, %v1390
        %v1459 = vmul.f32 %v1189, %v1404
        %v1460 = vmul.f32 %v1192, %v1418
        %v1461 = vmul.f32 %v1218, %v1432
        %v1462 = vmul.f32 %v1221, %v1446
        %1465 = vrot.lane.b32.xlu0 %v1449, 8
        %v1466 = vpop.permute.xlu0 %1465
        %1467 = vrot.lane.b32.xlu0 %v1450, 8
        %v1468 = vpop.permute.xlu0 %1467
        %1473 = vrot.lane.b32.xlu0 %v1451, 16
        %v1474 = vpop.permute.xlu0 %1473
        %1475 = vrot.lane.b32.xlu0 %v1452, 16
        %v1476 = vpop.permute.xlu0 %1475
        %1481 = vrot.lane.b32.xlu0 %v1453, 24
        %v1482 = vpop.permute.xlu0 %1481
        %1483 = vrot.lane.b32.xlu0 %v1454, 24
        %v1484 = vpop.permute.xlu0 %1483
        %1489 = vrot.lane.b32.xlu0 %v1455, 32
        %v1490 = vpop.permute.xlu0 %1489
        %1491 = vrot.lane.b32.xlu0 %v1456, 32
        %v1492 = vpop.permute.xlu0 %1491
        %1497 = vrot.lane.b32.xlu0 %v1457, 40
        %v1498 = vpop.permute.xlu0 %1497
        %1499 = vrot.lane.b32.xlu0 %v1458, 40
        %v1500 = vpop.permute.xlu0 %1499
        %1505 = vrot.lane.b32.xlu0 %v1459, 48
        %v1506 = vpop.permute.xlu0 %1505
        %1507 = vrot.lane.b32.xlu0 %v1460, 48
        %v1508 = vpop.permute.xlu0 %1507
        %1513 = vrot.lane.b32.xlu0 %v1461, 56
        %v1514 = vpop.permute.xlu0 %1513
        %1515 = vrot.lane.b32.xlu0 %v1462, 56
        %v1516 = vpop.permute.xlu0 %1515
        %v1519 = vsel %vm597, %v1447, %v1466
        %v1520 = vsel %vm597, %v1448, %v1468
        %v1521 = vsel %vm846, %v1519, %v1474
        %v1522 = vsel %vm846, %v1520, %v1476
        %vm1523 = vcmask 195584
        %v1524 = vsel %vm1523, %v1521, %v1482
        %v1525 = vsel %vm1523, %v1522, %v1484
        %vm1526 = vcmask 261120
        %v1527 = vsel %vm1526, %v1524, %v1490
        %v1528 = vsel %vm1526, %v1525, %v1492
        %vm1529 = vcmask 326656
        %v1530 = vsel %vm1529, %v1527, %v1498
        %v1531 = vsel %vm1529, %v1528, %v1500
        %vm1532 = vcmask 392192
        %v1533 = vsel %vm1532, %v1530, %v1506
        %v1534 = vsel %vm1532, %v1531, %v1508
        %vm1535 = vcmask 457728
        %v1536 = vsel %vm1535, %v1533, %v1514
        %v1537 = vsel %vm1535, %v1534, %v1516
        %v1538 = vld [vmem:[#allocation2] sm:$0xff]
        %v1539 = vld [vmem:[#allocation2 + $0x8] sm:$0xff]
        %v1541 = vsel %vm406, %v1536, 0
        %v1544 = vsel %vm406, %v1537, 0
        %1546 = vmatpush.msra.mxu0 0.0
        %1547 = vmatpush.msra.mxu0 0.0
        %1548 = vmatpush.msra.mxu0 0.0
        %1549 = vmatpush.msra.mxu0 0.0
        %1550 = vmatpush.msra.mxu0 0.0
        %1551 = vmatpush.msra.mxu0 0.0
        %1552 = vmatpush.msra.mxu0 0.0
        %1553 = vmatpush.msra.mxu0 0.0
        %1554 = vmatpush.msra.mxu0 %v403
        %1555 = vmatpush.msra.mxu0 %v402
        %1556 = vmatpush.msra.mxu0 %v401
        %1557 = vmatpush.msra.mxu0 %v400
        %1558 = vmatpush.msra.mxu0 %v399
        %1559 = vmatpush.msra.mxu0 %v398
        %1560 = vmatpush.msra.mxu0 %v397
        %1561 = vmatpush.msra.mxu0 %v396
        %1562 = vmatmul.f32.gmra.mxu0 %v1541
        %v1563 = vpop.f32.mrf.mxu0
        %v1564 = vadd.f32 0.0, %v1563
        %1565 = vmatmul.f32.gmra.mxu0 %v1544
        %v1566 = vpop.f32.mrf.mxu0
        %v1567 = vadd.f32 0.0, %v1566
        %1568 = vdwg.mxu0
        %v1569 = vadd.f32 %v1538, %v1564
        %v1570 = vadd.f32 %v1539, %v1567
        %1571 = vst.msk [vmem:[#allocation2] sm:$0xff] %vm406, %v1569
        %1572 = vst.msk [vmem:[#allocation2 + $0x8] sm:$0xff] %vm406, %v1570
        // Predicated region
        $region69: #{tpu_custom_call.1} parent=43 // pred_check
          %p1573 = pneg %p360
        $region70: #{tpu_custom_call.1} parent=43 // pred_check_branch
          %1575 = sbr.rel (%p1573) target = $region72
        $region71: #{tpu_custom_call.1} parent=43 // pred_region
          %v1576 = vld [vmem:[#allocation2] sm:$0xff]
          %v1577 = vld [vmem:[#allocation2 + $0x8] sm:$0xff]
          %v1578 = vld [vmem:[%s5] sm:$0x1]
          %v1580 = vperm.slane %v1578, 0
          %v1582 = vadd.f32 %v1576, %v1580
          %v1583 = vadd.f32 %v1577, %v1580
          %1584 = vst.msk [vmem:[%s358] sm:$0xff] %vm406, %v1582
          %1585 = vst.msk [vmem:[%s358 + $0x8] sm:$0xff] %vm406, %v1583
        $region72: #{tpu_custom_call.1} parent=43 // pred_fallthru
          _
        %s1586 = sand.u32 %s185, 1
        %s1587 = scalar_lea.sflag [#allocation5], %s1586
        %s1588 = sand.u32 %s185, 1
        %s1589 = smul.addr %s1588, 16
        %s1590 = scalar_lea.vmem [#allocation12], %s1589
        // Predicated region
        $region73: #{tpu_custom_call.1} parent=43 // pred_check
          %p1591 = pneg %p195
        $region74: #{tpu_custom_call.1} parent=43 // pred_check_branch
          %1593 = sbr.rel (%p1591) target = $region76
        $region75: #{tpu_custom_call.1} parent=43 // pred_region
          %s1594 = smul.u32 2, %s31
          %1596 = vsyncadd %s1587, 0
          %s1597 = smul.addr %s30, 2
          %s1598 = sadd.s32 %s1594, %s1597
          %s1599 = smul.addr %s1598, 8
          %s1600 = scalar_lea.hbm %s6, %s1599
          %s1601 = sshll.u32 %s1590, 4
          %s1602 = int_to_ptr.vmem [resolvable:$true] %s1601
          %s1603 = sshll.u32 %s1600, 4
          %s1604 = int_to_ptr.hbm [resolvable:$true] %s1603
          %1609 = dma.vmem_to_hbm [thread:$0]  %s1602, 256, %s1604, %s1587, 128, 128, 8
        $region76: #{tpu_custom_call.1} parent=43 // pred_fallthru
          _
      $region44: #{tpu_custom_call.1} parent=5 // pred_fallthru
        _
      %p1610 = scmp.le.s32.totalorder 2, %s20
      // Predicated region
      $region77: #{tpu_custom_call.1} parent=5 // pred_check
        %p1611 = pneg %p1610
      $region78: #{tpu_custom_call.1} parent=5 // pred_check_branch
        %1613 = sbr.rel (%p1611) target = $region80
      $region79: #{tpu_custom_call.1} parent=5 // pred_region
        %s1614 = ssub.s32 %s20, 2
        // Predicated region
        $region81: #{tpu_custom_call.1} parent=79 // pred_check
          %p1615 = pneg %p201
        $region82: #{tpu_custom_call.1} parent=79 // pred_check_branch
          %1617 = sbr.rel (%p1615) target = $region84
        $region83: #{tpu_custom_call.1} parent=79 // pred_region
          %s1618 = sand.u32 %s186, 1
          %s1619 = scalar_lea.sflag [#allocation5], %s1618
          %s1620 = sand.u32 %s186, 1
          %s1621 = smul.addr %s1620, 16
          %s1622 = scalar_lea.vmem [#allocation12], %s1621
          %1624 = dma.done %s1619, 256
        $region84: #{tpu_custom_call.1} parent=79 // pred_fallthru
          _
      $region80: #{tpu_custom_call.1} parent=5 // pred_fallthru
        _
    $region6: #{tpu_custom_call.1} parent=1 // loop_footer
      %s24 = sadd.s32 1, %s20
    $region7: #{tpu_custom_call.1} parent=1 // loop_footer_branch
      %19 = sbr.rel target = $region3
    $region8: #{tpu_custom_call.1} parent=1 // loop_exit
      _
    %1625 = vsyncpa [#allocation4], 1
    %s1626 = scalar_lea.sflag [#allocation4], 1
    %1627 = vsyncpa %s1626, 1
    %1628 = vsyncpa [#allocation7], 1
    %1629 = vsyncpa [#allocation10], 1
    %1630 = vsyncpa [#allocation5], 1
    %s1631 = scalar_lea.sflag [#allocation5], 1
    %1632 = vsyncpa %s1631, 1

</llo_original>
